<compile_context>
chip_gen: v7x
topology: tpu7x:2x2x1
jax: 0.10.0
libtpu: 0.0.40
codegen_flags: <defaults>
</compile_context>

<pallas_src>
import functools

import jax
import jax.numpy as jnp
from jax.experimental import pallas as pl
from jax.experimental.pallas import tpu as pltpu

_IN_DIM = 28 * 28                 # 784
_H1_PAD = 384                     # 300 -> 384
_H2_PAD = 128                     # 100 -> 128
_OUT_PAD = 128                    # o_dim -> 128 (lane-dense output stores)


def _round_up(n, m):
    return ((n + m - 1) // m) * m


# ----------------------------------------------------------------------------
# Kernel
# ----------------------------------------------------------------------------
def _lenet_kernel(x_ref, w1_ref, b1_ref, w2_ref, b2_ref, w3_ref, b3_ref, o_ref):
    # x_ref: (TB, 784) bf16 ; weights bf16 (z_mu pre-folded) ; biases f32.
    x = x_ref[...]

    # fc1 + relu_1   (784 -> 384)
    h = jnp.dot(x, w1_ref[...], preferred_element_type=jnp.float32) + b1_ref[...]
    h = jnp.maximum(h, 0.0)

    # fc2 + relu_2   (384 -> 128)
    h = jnp.dot(h.astype(jnp.bfloat16), w2_ref[...],
                preferred_element_type=jnp.float32) + b2_ref[...]
    h = jnp.maximum(h, 0.0)

    # fc3 (no activation)   (128 -> 128, lane-dense store)
    o_ref[...] = (jnp.dot(h.astype(jnp.bfloat16), w3_ref[...],
                          preferred_element_type=jnp.float32)
                  + b3_ref[...]).astype(o_ref.dtype)


# ----------------------------------------------------------------------------
# Wrapper
# ----------------------------------------------------------------------------
@functools.partial(jax.jit, static_argnames=("o_dim", "tb"))
def lenet300_100j_forward(x, params, *, o_dim=10, tb=512):
    """x: any shape with 784 trailing elements per row (mirrors x.view(-1, 784)).
    params: dict of padded bf16 weights (z folded in) + f32 biases, see
    prepare_params()."""
    B = x.size // _IN_DIM
    x2 = x.reshape(B, _IN_DIM).astype(jnp.bfloat16)

    # Batch tiling: tile must be a multiple of 8 sublanes; pad B up to it.
    TB = min(tb, _round_up(B, 8))
    B_pad = _round_up(B, TB)
    if B_pad != B:
        x2 = jnp.pad(x2, ((0, B_pad - B), (0, 0)))
    grid = (B_pad // TB,)

    w1, b1 = params["w1"], params["b1"]
    w2, b2 = params["w2"], params["b2"]
    w3, b3 = params["w3"], params["b3"]

    flops = 2 * B_pad * (_IN_DIM * _H1_PAD + _H1_PAD * _H2_PAD + _H2_PAD * _OUT_PAD)
    bytes_accessed = (x2.size * 2
                      + w1.size * 2 + w2.size * 2 + w3.size * 2
                      + (b1.size + b2.size + b3.size) * 4
                      + B_pad * _OUT_PAD * 4)

    out = pl.pallas_call(
        _lenet_kernel,
        out_shape=jax.ShapeDtypeStruct((B_pad, _OUT_PAD), jnp.float32),
        grid=grid,
        in_specs=[
            pl.BlockSpec((TB, _IN_DIM), lambda i: (i, 0)),        # x tile (streamed)
            pl.BlockSpec((_IN_DIM, _H1_PAD), lambda i: (0, 0)),   # W1 (resident)
            pl.BlockSpec((1, _H1_PAD), lambda i: (0, 0)),         # b1
            pl.BlockSpec((_H1_PAD, _H2_PAD), lambda i: (0, 0)),   # W2
            pl.BlockSpec((1, _H2_PAD), lambda i: (0, 0)),         # b2
            pl.BlockSpec((_H2_PAD, _OUT_PAD), lambda i: (0, 0)),  # W3
            pl.BlockSpec((1, _OUT_PAD), lambda i: (0, 0)),        # b3
        ],
        out_specs=pl.BlockSpec((TB, _OUT_PAD), lambda i: (i, 0)),
        compiler_params=pltpu.CompilerParams(
            dimension_semantics=("parallel",),
            vmem_limit_bytes=32 << 20,
        ),
        cost_estimate=pl.CostEstimate(
            flops=flops, transcendentals=0, bytes_accessed=bytes_accessed),
    )(x2, w1, b1, w2, b2, w3, b3)

    return out[:B, :o_dim]


# ----------------------------------------------------------------------------
# Parameter construction (synthetic LinearGroupNJ mu parameters)
# ----------------------------------------------------------------------------
def init_raw_params(key, i_dim=_IN_DIM, o_dim=10):
    """Raw parameters in the PyTorch LinearGroupNJ layout:
    weight_mu (out, in), bias_mu (out,), z_mu (in,)."""
    dims = [(i_dim, 300), (300, 100), (100, o_dim)]
    raw = {}
    for idx, (din, dout) in enumerate(dims, start=1):
        key, kw, kb, kz = jax.random.split(key, 4)
        stdv = 1.0 / jnp.sqrt(din)
        raw[f"w{idx}"] = jax.random.normal(kw, (dout, din), jnp.float32) * stdv
        raw[f"b{idx}"] = jax.random.normal(kb, (dout,), jnp.float32) * 0.1
        raw[f"z{idx}"] = 1.0 + 0.01 * jax.random.normal(kz, (din,), jnp.float32)
    return raw


def prepare_params(raw, o_dim=10):
    """Fold z_mu into the transposed weights, zero-pad to lane-friendly dims,
    cast weights to bf16 (biases stay f32 for the f32-accumulator add)."""
    real = (_IN_DIM, 300, 100, o_dim)
    padded = (_IN_DIM, _H1_PAD, _H2_PAD, _OUT_PAD)
    params = {}
    for idx in (1, 2, 3):
        din, dout = real[idx - 1], real[idx]
        pin, pout = padded[idx - 1], padded[idx]
        w = raw[f"w{idx}"]                      # (dout, din)
        z = raw[f"z{idx}"]                      # (din,)
        b = raw[f"b{idx}"]                      # (dout,)
        w_eff = (w * z[None, :]).T              # (din, dout), z folded in
        w_pad = jnp.zeros((pin, pout), jnp.float32).at[:din, :dout].set(w_eff)
        b_pad = jnp.zeros((1, pout), jnp.float32).at[0, :dout].set(b)
        params[f"w{idx}"] = w_pad.astype(jnp.bfloat16)
        params[f"b{idx}"] = b_pad
    return params


# ----------------------------------------------------------------------------
# References
# ----------------------------------------------------------------------------
def reference_forward_prepared(x, params, o_dim=10):
    """Mirrors the kernel math exactly (bf16 inputs, f32 accumulation)."""
    B = x.size // _IN_DIM
    h = x.reshape(B, _IN_DIM).astype(jnp.bfloat16)
    h = jnp.maximum(jnp.dot(h, params["w1"],
                            preferred_element_type=jnp.float32) + params["b1"], 0.0)
    h = jnp.maximum(jnp.dot(h.astype(jnp.bfloat16), params["w2"],
                            preferred_element_type=jnp.float32) + params["b2"], 0.0)
    out = jnp.dot(h.astype(jnp.bfloat16), params["w3"],
                  preferred_element_type=jnp.float32) + params["b3"]
    return out[:, :o_dim]


def reference_forward_original(x, raw):
    """Original eval-mode semantics in pure f32."""
    B = x.size // _IN_DIM
    h = x.reshape(B, _IN_DIM).astype(jnp.float32)
    h = jnp.maximum((h * raw["z1"]) @ raw["w1"].T + raw["b1"], 0.0)
    h = jnp.maximum((h * raw["z2"]) @ raw["w2"].T + raw["b2"], 0.0)
    return (h * raw["z3"]) @ raw["w3"].T + raw["b3"]


if __name__ == "__main__":
    key = jax.random.PRNGKey(0)
    key, kx = jax.random.split(key)

    # NCHW MNIST-like input: (batch=4, channels=1, 28, 28) -> view(-1, 784)
    x = jax.random.normal(kx, (4, 1, 28, 28), jnp.float32)

    raw = init_raw_params(key, i_dim=_IN_DIM, o_dim=10)
    params = prepare_params(raw, o_dim=10)

    out = lenet300_100j_forward(x, params, o_dim=10)
    out = jax.block_until_ready(out)
    assert out.shape == (4, 10), out.shape

    # Exact-path check (same bf16/f32-accumulate math as the kernel).
    ref_p = reference_forward_prepared(x, params, o_dim=10)
    assert jnp.allclose(out, ref_p, atol=2e-3, rtol=2e-3), "mismatch vs prepared ref"

    # Sanity check vs original f32 eval-mode semantics (bf16 quantization only).
    ref_o = reference_forward_original(x, raw)
    assert jnp.allclose(out, ref_o, atol=5e-2, rtol=5e-2), "mismatch vs original ref"

    print("KERNEL_OK")
</pallas_src>

<mosaic_0001>
module attributes {stable_mosaic.version = 11 : i64} {
  func.func @_lenet_kernel(%arg0: i32, %arg1: memref<8x784xbf16, #tpu.memory_space<vmem>>, %arg2: memref<784x384xbf16, #tpu.memory_space<vmem>>, %arg3: memref<1x384xf32, #tpu.memory_space<vmem>>, %arg4: memref<384x128xbf16, #tpu.memory_space<vmem>>, %arg5: memref<1x128xf32, #tpu.memory_space<vmem>>, %arg6: memref<128x128xbf16, #tpu.memory_space<vmem>>, %arg7: memref<1x128xf32, #tpu.memory_space<vmem>>, %arg8: memref<8x128xf32, #tpu.memory_space<vmem>>) attributes {dimension_semantics = [#tpu.dimension_semantics<parallel>], iteration_bounds = array<i64: 1>, scalar_prefetch = 0 : i64, scratch_operands = 0 : i64, tpu.core_type = #tpu.core_type<tc>, window_params = [{transform_indices = @transform_0, window_bounds = array<i64: 8, 784>}, {pipeline_mode = #tpu.pipeline_mode<synchronous>, transform_indices = @transform_1, window_bounds = array<i64: 784, 384>}, {pipeline_mode = #tpu.pipeline_mode<synchronous>, transform_indices = @transform_2, window_bounds = array<i64: 1, 384>}, {pipeline_mode = #tpu.pipeline_mode<synchronous>, transform_indices = @transform_3, window_bounds = array<i64: 384, 128>}, {pipeline_mode = #tpu.pipeline_mode<synchronous>, transform_indices = @transform_4, window_bounds = array<i64: 1, 128>}, {pipeline_mode = #tpu.pipeline_mode<synchronous>, transform_indices = @transform_5, window_bounds = array<i64: 128, 128>}, {pipeline_mode = #tpu.pipeline_mode<synchronous>, transform_indices = @transform_6, window_bounds = array<i64: 1, 128>}, {transform_indices = @transform_7, window_bounds = array<i64: 8, 128>}]} {
    %c0 = arith.constant 0 : index
    %c0_0 = arith.constant 0 : index
    %0 = vector.load %arg1[%c0, %c0_0] : memref<8x784xbf16, #tpu.memory_space<vmem>>, vector<8x784xbf16>
    %c0_1 = arith.constant 0 : index
    %c0_2 = arith.constant 0 : index
    %1 = vector.load %arg2[%c0_1, %c0_2] : memref<784x384xbf16, #tpu.memory_space<vmem>>, vector<784x384xbf16>
    %cst = arith.constant dense<0.000000e+00> : vector<8x384xf32>
    %2 = tpu.matmul %0, %1, %cst {dimension_numbers = #tpu.dot_dimension_numbers<[1], [0], [0], [1], [0, 0, 1, 1], [], []>} : vector<8x784xbf16>, vector<784x384xbf16>, vector<8x384xf32> -> vector<8x384xf32>
    %c0_3 = arith.constant 0 : index
    %c0_4 = arith.constant 0 : index
    %3 = vector.load %arg3[%c0_3, %c0_4] : memref<1x384xf32, #tpu.memory_space<vmem>>, vector<1x384xf32>
    %4 = vector.broadcast %3 : vector<1x384xf32> to vector<8x384xf32>
    %5 = arith.addf %2, %4 : vector<8x384xf32>
    %cst_5 = arith.constant 0.000000e+00 : f32
    %6 = vector.broadcast %cst_5 : f32 to vector<8x384xf32>
    %7 = arith.maximumf %5, %6 : vector<8x384xf32>
    %8 = arith.truncf %7 : vector<8x384xf32> to vector<8x384xbf16>
    %c0_6 = arith.constant 0 : index
    %c0_7 = arith.constant 0 : index
    %9 = vector.load %arg4[%c0_6, %c0_7] : memref<384x128xbf16, #tpu.memory_space<vmem>>, vector<384x128xbf16>
    %cst_8 = arith.constant dense<0.000000e+00> : vector<8x128xf32>
    %10 = tpu.matmul %8, %9, %cst_8 {dimension_numbers = #tpu.dot_dimension_numbers<[1], [0], [0], [1], [0, 0, 1, 1], [], []>} : vector<8x384xbf16>, vector<384x128xbf16>, vector<8x128xf32> -> vector<8x128xf32>
    %c0_9 = arith.constant 0 : index
    %c0_10 = arith.constant 0 : index
    %11 = vector.load %arg5[%c0_9, %c0_10] : memref<1x128xf32, #tpu.memory_space<vmem>>, vector<1x128xf32>
    %12 = vector.broadcast %11 : vector<1x128xf32> to vector<8x128xf32>
    %13 = arith.addf %10, %12 : vector<8x128xf32>
    %cst_11 = arith.constant 0.000000e+00 : f32
    %14 = vector.broadcast %cst_11 : f32 to vector<8x128xf32>
    %15 = arith.maximumf %13, %14 : vector<8x128xf32>
    %16 = arith.truncf %15 : vector<8x128xf32> to vector<8x128xbf16>
    %c0_12 = arith.constant 0 : index
    %c0_13 = arith.constant 0 : index
    %17 = vector.load %arg6[%c0_12, %c0_13] : memref<128x128xbf16, #tpu.memory_space<vmem>>, vector<128x128xbf16>
    %cst_14 = arith.constant dense<0.000000e+00> : vector<8x128xf32>
    %18 = tpu.matmul %16, %17, %cst_14 {dimension_numbers = #tpu.dot_dimension_numbers<[1], [0], [0], [1], [0, 0, 1, 1], [], []>} : vector<8x128xbf16>, vector<128x128xbf16>, vector<8x128xf32> -> vector<8x128xf32>
    %c0_15 = arith.constant 0 : index
    %c0_16 = arith.constant 0 : index
    %19 = vector.load %arg7[%c0_15, %c0_16] : memref<1x128xf32, #tpu.memory_space<vmem>>, vector<1x128xf32>
    %20 = vector.broadcast %19 : vector<1x128xf32> to vector<8x128xf32>
    %21 = arith.addf %18, %20 : vector<8x128xf32>
    %c0_17 = arith.constant 0 : index
    %c0_18 = arith.constant 0 : index
    %22 = vector.load %arg8[%c0_17, %c0_18] : memref<8x128xf32, #tpu.memory_space<vmem>>, vector<8x128xf32>
    tpu.vector_store %arg8[%c0_17, %c0_18], %21 {strides = array<i32>} : memref<8x128xf32, #tpu.memory_space<vmem>>, vector<8x128xf32>,
    return
  }
  func.func @transform_0(%arg0: i32) -> (i32, i32) {
    %c0_i32 = arith.constant 0 : i32
    %c0_i32_0 = arith.constant 0 : i32
    return %arg0, %c0_i32 : i32, i32
  }
  func.func @transform_1(%arg0: i32) -> (i32, i32) {
    %c0_i32 = arith.constant 0 : i32
    %c0_i32_0 = arith.constant 0 : i32
    %c0_i32_1 = arith.constant 0 : i32
    return %c0_i32, %c0_i32_0 : i32, i32
  }
  func.func @transform_2(%arg0: i32) -> (i32, i32) {
    %c0_i32 = arith.constant 0 : i32
    %c0_i32_0 = arith.constant 0 : i32
    %c0_i32_1 = arith.constant 0 : i32
    return %c0_i32, %c0_i32_0 : i32, i32
  }
  func.func @transform_3(%arg0: i32) -> (i32, i32) {
    %c0_i32 = arith.constant 0 : i32
    %c0_i32_0 = arith.constant 0 : i32
    %c0_i32_1 = arith.constant 0 : i32
    return %c0_i32, %c0_i32_0 : i32, i32
  }
  func.func @transform_4(%arg0: i32) -> (i32, i32) {
    %c0_i32 = arith.constant 0 : i32
    %c0_i32_0 = arith.constant 0 : i32
    %c0_i32_1 = arith.constant 0 : i32
    return %c0_i32, %c0_i32_0 : i32, i32
  }
  func.func @transform_5(%arg0: i32) -> (i32, i32) {
    %c0_i32 = arith.constant 0 : i32
    %c0_i32_0 = arith.constant 0 : i32
    %c0_i32_1 = arith.constant 0 : i32
    return %c0_i32, %c0_i32_0 : i32, i32
  }
  func.func @transform_6(%arg0: i32) -> (i32, i32) {
    %c0_i32 = arith.constant 0 : i32
    %c0_i32_0 = arith.constant 0 : i32
    %c0_i32_1 = arith.constant 0 : i32
    return %c0_i32, %c0_i32_0 : i32, i32
  }
  func.func @transform_7(%arg0: i32) -> (i32, i32) {
    %c0_i32 = arith.constant 0 : i32
    %c0_i32_0 = arith.constant 0 : i32
    return %arg0, %c0_i32 : i32, i32
  }
}

</mosaic_0001>

<llo_original>
// kernel: lenet300_100j_forward.1
$region0: #{lenet300_100j_forward.1}
  #allocation0 [shape = 'u32[]', space=smem, size = 0x4, offset = 0x4, fixed_abs, tag = 'smem constant byte address 0x4 - core index']
  #allocation1 [shape = 'u32[144,128]{1,0:T(1,128)}', space=vmem, size = 0x12000, scoped, tag = 'internal scratch']
  %s0 = inlined_call_operand.vmem [shape: bf16[8,784], index: 0, kind: input, shape index: {}]
  %s1 = inlined_call_operand.hbm [shape: bf16[784,384], index: 1, kind: input, shape index: {}]
  %s2 = inlined_call_operand.vmem [shape: f32[1,384], index: 2, kind: input, shape index: {}]
  %s3 = inlined_call_operand.vmem [shape: bf16[384,128], index: 3, kind: input, shape index: {}]
  %s4 = inlined_call_operand.vmem [shape: f32[1,128], index: 4, kind: input, shape index: {}]
  %s5 = inlined_call_operand.vmem [shape: bf16[128,128], index: 5, kind: input, shape index: {}]
  %s6 = inlined_call_operand.vmem [shape: f32[1,128], index: 6, kind: input, shape index: {}]
  %s7 = inlined_call_operand.vmem [shape: f32[8,128], index: 7, kind: output, shape index: {}]
  %s8 = sld [smem:[#allocation0]]
  $region42: #{lenet300_100j_forward.1} parent=0
    _
  %s10 = ssub.s32 1, %s8
  %s11 = scalar_select 0, %s10, %s8
  $region1: #{lenet300_100j_forward.1} parent=0
    #allocation2 [shape = 'u8[602112]{0}', space=vmem, size = 0x93000, scoped, tag = 'input window, operand 1, single buffered']
    #allocation3 [shape = 's32[1]{0}', space=sflag, size = 0x4, scoped, tag = 'scoped memory for lenet300_100j_forward.1']
    %12 = vsyncpa [#allocation3], 0
    // Predicated region
    $region2: #{lenet300_100j_forward.1} parent=1 // pred_check
      _
    $region3: #{lenet300_100j_forward.1} parent=1 // pred_check_branch
      %14 = sbr.rel (0) target = $region5
    $region4: #{lenet300_100j_forward.1} parent=1 // pred_region
      _
    $region5: #{lenet300_100j_forward.1} parent=1 // pred_fallthru
      _
    // Predicated region
    $region6: #{lenet300_100j_forward.1} parent=1 // pred_check
      _
    $region7: #{lenet300_100j_forward.1} parent=1 // pred_check_branch
      %16 = sbr.rel (0) target = $region9
    $region8: #{lenet300_100j_forward.1} parent=1 // pred_region
      %s18 = ssub.s32 18816, 18816
      %19 = vsyncadd [#allocation3], %s18
      %s20 = sshll.u32 [#allocation2], 4
      %s21 = int_to_ptr.vmem [resolvable:$true] %s20
      %26 = dma.hbm_to_vmem [thread:$0]  %s1, 18816, %s21, [#allocation3], 192, 192, 12
    $region9: #{lenet300_100j_forward.1} parent=1 // pred_fallthru
      _
    // Predicated region
    $region10: #{lenet300_100j_forward.1} parent=1 // pred_check
      _
    $region11: #{lenet300_100j_forward.1} parent=1 // pred_check_branch
      %28 = sbr.rel (0) target = $region13
    $region12: #{lenet300_100j_forward.1} parent=1 // pred_region
      _
    $region13: #{lenet300_100j_forward.1} parent=1 // pred_fallthru
      _
    // Predicated region
    $region14: #{lenet300_100j_forward.1} parent=1 // pred_check
      _
    $region15: #{lenet300_100j_forward.1} parent=1 // pred_check_branch
      %30 = sbr.rel (0) target = $region17
    $region16: #{lenet300_100j_forward.1} parent=1 // pred_region
      _
    $region17: #{lenet300_100j_forward.1} parent=1 // pred_fallthru
      _
    // Predicated region
    $region18: #{lenet300_100j_forward.1} parent=1 // pred_check
      _
    $region19: #{lenet300_100j_forward.1} parent=1 // pred_check_branch
      %32 = sbr.rel (0) target = $region21
    $region20: #{lenet300_100j_forward.1} parent=1 // pred_region
      _
    $region21: #{lenet300_100j_forward.1} parent=1 // pred_fallthru
      _
    // Predicated region
    $region22: #{lenet300_100j_forward.1} parent=1 // pred_check
      _
    $region23: #{lenet300_100j_forward.1} parent=1 // pred_check_branch
      %34 = sbr.rel (0) target = $region25
    $region24: #{lenet300_100j_forward.1} parent=1 // pred_region
      _
    $region25: #{lenet300_100j_forward.1} parent=1 // pred_fallthru
      _
    // Predicated region
    $region26: #{lenet300_100j_forward.1} parent=1 // pred_check
      _
    $region27: #{lenet300_100j_forward.1} parent=1 // pred_check_branch
      %36 = sbr.rel (0) target = $region29
    $region28: #{lenet300_100j_forward.1} parent=1 // pred_region
      _
    $region29: #{lenet300_100j_forward.1} parent=1 // pred_fallthru
      _
    // Predicated region
    $region30: #{lenet300_100j_forward.1} parent=1 // pred_check
      _
    $region31: #{lenet300_100j_forward.1} parent=1 // pred_check_branch
      %38 = sbr.rel (0) target = $region33
    $region32: #{lenet300_100j_forward.1} parent=1 // pred_region
      %39 = dma.done [#allocation3], 18816
    $region33: #{lenet300_100j_forward.1} parent=1 // pred_fallthru
      _
    %v41 = vld [vmem:[%s0] sm:$0xff]
    %v42 = vld [vmem:[%s0 + $0x8] sm:$0xff]
    %v43 = vld [vmem:[%s0 + $0x10] sm:$0xff]
    %v44 = vld [vmem:[%s0 + $0x18] sm:$0xf]
    %v45 = vld [vmem:[#allocation2] sm:$0xff]
    %v46 = vld [vmem:[#allocation2 + $0x8] sm:$0xf]
    %v47 = vld [vmem:[#allocation2 + $0xc] sm:$0xff]
    %v48 = vld [vmem:[#allocation2 + $0x14] sm:$0xf]
    %v49 = vld [vmem:[#allocation2 + $0x18] sm:$0xff]
    %v50 = vld [vmem:[#allocation2 + $0x20] sm:$0xf]
    %v51 = vld [vmem:[#allocation2 + $0x24] sm:$0xff]
    %v52 = vld [vmem:[#allocation2 + $0x2c] sm:$0xf]
    %v53 = vld [vmem:[#allocation2 + $0x30] sm:$0xff]
    %v54 = vld [vmem:[#allocation2 + $0x38] sm:$0xf]
    %v55 = vld [vmem:[#allocation2 + $0x3c] sm:$0xff]
    %v56 = vld [vmem:[#allocation2 + $0x44] sm:$0xf]
    %v57 = vld [vmem:[#allocation2 + $0x48] sm:$0xff]
    %v58 = vld [vmem:[#allocation2 + $0x50] sm:$0xf]
    %v59 = vld [vmem:[#allocation2 + $0x54] sm:$0xff]
    %v60 = vld [vmem:[#allocation2 + $0x5c] sm:$0xf]
    %v61 = vld [vmem:[#allocation2 + $0x60] sm:$0xff]
    %v62 = vld [vmem:[#allocation2 + $0x68] sm:$0xf]
    %v63 = vld [vmem:[#allocation2 + $0x6c] sm:$0xff]
    %v64 = vld [vmem:[#allocation2 + $0x74] sm:$0xf]
    %v65 = vld [vmem:[#allocation2 + $0x78] sm:$0xff]
    %v66 = vld [vmem:[#allocation2 + $0x80] sm:$0xf]
    %v67 = vld [vmem:[#allocation2 + $0x84] sm:$0xff]
    %v68 = vld [vmem:[#allocation2 + $0x8c] sm:$0xf]
    %v69 = vld [vmem:[#allocation2 + $0x90] sm:$0xff]
    %v70 = vld [vmem:[#allocation2 + $0x98] sm:$0xf]
    %v71 = vld [vmem:[#allocation2 + $0x9c] sm:$0xff]
    %v72 = vld [vmem:[#allocation2 + $0xa4] sm:$0xf]
    %v73 = vld [vmem:[#allocation2 + $0xa8] sm:$0xff]
    %v74 = vld [vmem:[#allocation2 + $0xb0] sm:$0xf]
    %v75 = vld [vmem:[#allocation2 + $0xb4] sm:$0xff]
    %v76 = vld [vmem:[#allocation2 + $0xbc] sm:$0xf]
    %v77 = vld [vmem:[#allocation2 + $0xc0] sm:$0xff]
    %v78 = vld [vmem:[#allocation2 + $0xc8] sm:$0xf]
    %v79 = vld [vmem:[#allocation2 + $0xcc] sm:$0xff]
    %v80 = vld [vmem:[#allocation2 + $0xd4] sm:$0xf]
    %v81 = vld [vmem:[#allocation2 + $0xd8] sm:$0xff]
    %v82 = vld [vmem:[#allocation2 + $0xe0] sm:$0xf]
    %v83 = vld [vmem:[#allocation2 + $0xe4] sm:$0xff]
    %v84 = vld [vmem:[#allocation2 + $0xec] sm:$0xf]
    %v85 = vld [vmem:[#allocation2 + $0xf0] sm:$0xff]
    %v86 = vld [vmem:[#allocation2 + $0xf8] sm:$0xf]
    %v87 = vld [vmem:[#allocation2 + $0xfc] sm:$0xff]
    %v88 = vld [vmem:[#allocation2 + $0x104] sm:$0xf]
    %v89 = vld [vmem:[#allocation2 + $0x108] sm:$0xff]
    %v90 = vld [vmem:[#allocation2 + $0x110] sm:$0xf]
    %v91 = vld [vmem:[#allocation2 + $0x114] sm:$0xff]
    %v92 = vld [vmem:[#allocation2 + $0x11c] sm:$0xf]
    %v93 = vld [vmem:[#allocation2 + $0x120] sm:$0xff]
    %v94 = vld [vmem:[#allocation2 + $0x128] sm:$0xf]
    %v95 = vld [vmem:[#allocation2 + $0x12c] sm:$0xff]
    %v96 = vld [vmem:[#allocation2 + $0x134] sm:$0xf]
    %v97 = vld [vmem:[#allocation2 + $0x138] sm:$0xff]
    %v98 = vld [vmem:[#allocation2 + $0x140] sm:$0xf]
    %v99 = vld [vmem:[#allocation2 + $0x144] sm:$0xff]
    %v100 = vld [vmem:[#allocation2 + $0x14c] sm:$0xf]
    %v101 = vld [vmem:[#allocation2 + $0x150] sm:$0xff]
    %v102 = vld [vmem:[#allocation2 + $0x158] sm:$0xf]
    %v103 = vld [vmem:[#allocation2 + $0x15c] sm:$0xff]
    %v104 = vld [vmem:[#allocation2 + $0x164] sm:$0xf]
    %v105 = vld [vmem:[#allocation2 + $0x168] sm:$0xff]
    %v106 = vld [vmem:[#allocation2 + $0x170] sm:$0xf]
    %v107 = vld [vmem:[#allocation2 + $0x174] sm:$0xff]
    %v108 = vld [vmem:[#allocation2 + $0x17c] sm:$0xf]
    %v109 = vld [vmem:[#allocation2 + $0x180] sm:$0xff]
    %v110 = vld [vmem:[#allocation2 + $0x188] sm:$0xf]
    %v111 = vld [vmem:[#allocation2 + $0x18c] sm:$0xff]
    %v112 = vld [vmem:[#allocation2 + $0x194] sm:$0xf]
    %v113 = vld [vmem:[#allocation2 + $0x198] sm:$0xff]
    %v114 = vld [vmem:[#allocation2 + $0x1a0] sm:$0xf]
    %v115 = vld [vmem:[#allocation2 + $0x1a4] sm:$0xff]
    %v116 = vld [vmem:[#allocation2 + $0x1ac] sm:$0xf]
    %v117 = vld [vmem:[#allocation2 + $0x1b0] sm:$0xff]
    %v118 = vld [vmem:[#allocation2 + $0x1b8] sm:$0xf]
    %v119 = vld [vmem:[#allocation2 + $0x1bc] sm:$0xff]
    %v120 = vld [vmem:[#allocation2 + $0x1c4] sm:$0xf]
    %v121 = vld [vmem:[#allocation2 + $0x1c8] sm:$0xff]
    %v122 = vld [vmem:[#allocation2 + $0x1d0] sm:$0xf]
    %v123 = vld [vmem:[#allocation2 + $0x1d4] sm:$0xff]
    %v124 = vld [vmem:[#allocation2 + $0x1dc] sm:$0xf]
    %v125 = vld [vmem:[#allocation2 + $0x1e0] sm:$0xff]
    %v126 = vld [vmem:[#allocation2 + $0x1e8] sm:$0xf]
    %v127 = vld [vmem:[#allocation2 + $0x1ec] sm:$0xff]
    %v128 = vld [vmem:[#allocation2 + $0x1f4] sm:$0xf]
    %v129 = vld [vmem:[#allocation2 + $0x1f8] sm:$0xff]
    %v130 = vld [vmem:[#allocation2 + $0x200] sm:$0xf]
    %v131 = vld [vmem:[#allocation2 + $0x204] sm:$0xff]
    %v132 = vld [vmem:[#allocation2 + $0x20c] sm:$0xf]
    %v133 = vld [vmem:[#allocation2 + $0x210] sm:$0xff]
    %v134 = vld [vmem:[#allocation2 + $0x218] sm:$0xf]
    %v135 = vld [vmem:[#allocation2 + $0x21c] sm:$0xff]
    %v136 = vld [vmem:[#allocation2 + $0x224] sm:$0xf]
    %v137 = vld [vmem:[#allocation2 + $0x228] sm:$0xff]
    %v138 = vld [vmem:[#allocation2 + $0x230] sm:$0xf]
    %v139 = vld [vmem:[#allocation2 + $0x234] sm:$0xff]
    %v140 = vld [vmem:[#allocation2 + $0x23c] sm:$0xf]
    %v141 = vld [vmem:[#allocation2 + $0x240] sm:$0xff]
    %v142 = vld [vmem:[#allocation2 + $0x248] sm:$0xf]
    %v143 = vld [vmem:[#allocation2 + $0x24c] sm:$0xff]
    %v144 = vld [vmem:[#allocation2 + $0x254] sm:$0xf]
    %v145 = vld [vmem:[#allocation2 + $0x258] sm:$0xff]
    %v146 = vld [vmem:[#allocation2 + $0x260] sm:$0xf]
    %v147 = vld [vmem:[#allocation2 + $0x264] sm:$0xff]
    %v148 = vld [vmem:[#allocation2 + $0x26c] sm:$0xf]
    %v149 = vld [vmem:[#allocation2 + $0x270] sm:$0xff]
    %v150 = vld [vmem:[#allocation2 + $0x278] sm:$0xf]
    %v151 = vld [vmem:[#allocation2 + $0x27c] sm:$0xff]
    %v152 = vld [vmem:[#allocation2 + $0x284] sm:$0xf]
    %v153 = vld [vmem:[#allocation2 + $0x288] sm:$0xff]
    %v154 = vld [vmem:[#allocation2 + $0x290] sm:$0xf]
    %v155 = vld [vmem:[#allocation2 + $0x294] sm:$0xff]
    %v156 = vld [vmem:[#allocation2 + $0x29c] sm:$0xf]
    %v157 = vld [vmem:[#allocation2 + $0x2a0] sm:$0xff]
    %v158 = vld [vmem:[#allocation2 + $0x2a8] sm:$0xf]
    %v159 = vld [vmem:[#allocation2 + $0x2ac] sm:$0xff]
    %v160 = vld [vmem:[#allocation2 + $0x2b4] sm:$0xf]
    %v161 = vld [vmem:[#allocation2 + $0x2b8] sm:$0xff]
    %v162 = vld [vmem:[#allocation2 + $0x2c0] sm:$0xf]
    %v163 = vld [vmem:[#allocation2 + $0x2c4] sm:$0xff]
    %v164 = vld [vmem:[#allocation2 + $0x2cc] sm:$0xf]
    %v165 = vld [vmem:[#allocation2 + $0x2d0] sm:$0xff]
    %v166 = vld [vmem:[#allocation2 + $0x2d8] sm:$0xf]
    %v167 = vld [vmem:[#allocation2 + $0x2dc] sm:$0xff]
    %v168 = vld [vmem:[#allocation2 + $0x2e4] sm:$0xf]
    %v169 = vld [vmem:[#allocation2 + $0x2e8] sm:$0xff]
    %v170 = vld [vmem:[#allocation2 + $0x2f0] sm:$0xf]
    %v171 = vld [vmem:[#allocation2 + $0x2f4] sm:$0xff]
    %v172 = vld [vmem:[#allocation2 + $0x2fc] sm:$0xf]
    %v173 = vld [vmem:[#allocation2 + $0x300] sm:$0xff]
    %v174 = vld [vmem:[#allocation2 + $0x308] sm:$0xf]
    %v175 = vld [vmem:[#allocation2 + $0x30c] sm:$0xff]
    %v176 = vld [vmem:[#allocation2 + $0x314] sm:$0xf]
    %v177 = vld [vmem:[#allocation2 + $0x318] sm:$0xff]
    %v178 = vld [vmem:[#allocation2 + $0x320] sm:$0xf]
    %v179 = vld [vmem:[#allocation2 + $0x324] sm:$0xff]
    %v180 = vld [vmem:[#allocation2 + $0x32c] sm:$0xf]
    %v181 = vld [vmem:[#allocation2 + $0x330] sm:$0xff]
    %v182 = vld [vmem:[#allocation2 + $0x338] sm:$0xf]
    %v183 = vld [vmem:[#allocation2 + $0x33c] sm:$0xff]
    %v184 = vld [vmem:[#allocation2 + $0x344] sm:$0xf]
    %v185 = vld [vmem:[#allocation2 + $0x348] sm:$0xff]
    %v186 = vld [vmem:[#allocation2 + $0x350] sm:$0xf]
    %v187 = vld [vmem:[#allocation2 + $0x354] sm:$0xff]
    %v188 = vld [vmem:[#allocation2 + $0x35c] sm:$0xf]
    %v189 = vld [vmem:[#allocation2 + $0x360] sm:$0xff]
    %v190 = vld [vmem:[#allocation2 + $0x368] sm:$0xf]
    %v191 = vld [vmem:[#allocation2 + $0x36c] sm:$0xff]
    %v192 = vld [vmem:[#allocation2 + $0x374] sm:$0xf]
    %v193 = vld [vmem:[#allocation2 + $0x378] sm:$0xff]
    %v194 = vld [vmem:[#allocation2 + $0x380] sm:$0xf]
    %v195 = vld [vmem:[#allocation2 + $0x384] sm:$0xff]
    %v196 = vld [vmem:[#allocation2 + $0x38c] sm:$0xf]
    %v197 = vld [vmem:[#allocation2 + $0x390] sm:$0xff]
    %v198 = vld [vmem:[#allocation2 + $0x398] sm:$0xf]
    %v199 = vld [vmem:[#allocation2 + $0x39c] sm:$0xff]
    %v200 = vld [vmem:[#allocation2 + $0x3a4] sm:$0xf]
    %v201 = vld [vmem:[#allocation2 + $0x3a8] sm:$0xff]
    %v202 = vld [vmem:[#allocation2 + $0x3b0] sm:$0xf]
    %v203 = vld [vmem:[#allocation2 + $0x3b4] sm:$0xff]
    %v204 = vld [vmem:[#allocation2 + $0x3bc] sm:$0xf]
    %v205 = vld [vmem:[#allocation2 + $0x3c0] sm:$0xff]
    %v206 = vld [vmem:[#allocation2 + $0x3c8] sm:$0xf]
    %v207 = vld [vmem:[#allocation2 + $0x3cc] sm:$0xff]
    %v208 = vld [vmem:[#allocation2 + $0x3d4] sm:$0xf]
    %v209 = vld [vmem:[#allocation2 + $0x3d8] sm:$0xff]
    %v210 = vld [vmem:[#allocation2 + $0x3e0] sm:$0xf]
    %v211 = vld [vmem:[#allocation2 + $0x3e4] sm:$0xff]
    %v212 = vld [vmem:[#allocation2 + $0x3ec] sm:$0xf]
    %v213 = vld [vmem:[#allocation2 + $0x3f0] sm:$0xff]
    %v214 = vld [vmem:[#allocation2 + $0x3f8] sm:$0xf]
    %v215 = vld [vmem:[#allocation2 + $0x3fc] sm:$0xff]
    %v216 = vld [vmem:[#allocation2 + $0x404] sm:$0xf]
    %v217 = vld [vmem:[#allocation2 + $0x408] sm:$0xff]
    %v218 = vld [vmem:[#allocation2 + $0x410] sm:$0xf]
    %v219 = vld [vmem:[#allocation2 + $0x414] sm:$0xff]
    %v220 = vld [vmem:[#allocation2 + $0x41c] sm:$0xf]
    %v221 = vld [vmem:[#allocation2 + $0x420] sm:$0xff]
    %v222 = vld [vmem:[#allocation2 + $0x428] sm:$0xf]
    %v223 = vld [vmem:[#allocation2 + $0x42c] sm:$0xff]
    %v224 = vld [vmem:[#allocation2 + $0x434] sm:$0xf]
    %v225 = vld [vmem:[#allocation2 + $0x438] sm:$0xff]
    %v226 = vld [vmem:[#allocation2 + $0x440] sm:$0xf]
    %v227 = vld [vmem:[#allocation2 + $0x444] sm:$0xff]
    %v228 = vld [vmem:[#allocation2 + $0x44c] sm:$0xf]
    %v229 = vld [vmem:[#allocation2 + $0x450] sm:$0xff]
    %v230 = vld [vmem:[#allocation2 + $0x458] sm:$0xf]
    %v231 = vld [vmem:[#allocation2 + $0x45c] sm:$0xff]
    %v232 = vld [vmem:[#allocation2 + $0x464] sm:$0xf]
    %v233 = vld [vmem:[#allocation2 + $0x468] sm:$0xff]
    %v234 = vld [vmem:[#allocation2 + $0x470] sm:$0xf]
    %v235 = vld [vmem:[#allocation2 + $0x474] sm:$0xff]
    %v236 = vld [vmem:[#allocation2 + $0x47c] sm:$0xf]
    %v237 = vld [vmem:[#allocation2 + $0x480] sm:$0xff]
    %v238 = vld [vmem:[#allocation2 + $0x488] sm:$0xf]
    %v239 = vld [vmem:[#allocation2 + $0x48c] sm:$0xff]
    %v240 = vld [vmem:[#allocation2 + $0x494] sm:$0xf]
    %v241 = vld [vmem:[%s2] sm:$0x7]
    %v243 = vlaneseq
    %v244 = vshrl.u32 %v243, 7
    %v245 = vsub.s32 0, %v244
    %v246 = vrot.slane %v241, %v245
    %v247 = vlaneseq
    %v248 = vshrl.u32 %v247, 7
    %v249 = vsub.s32 1, %v248
    %v250 = vrot.slane %v241, %v249
    %v251 = vlaneseq
    %v252 = vshrl.u32 %v251, 7
    %v253 = vsub.s32 2, %v252
    %v254 = vrot.slane %v241, %v253
    %v262 = vunpack.c.l.b16 %v41
    %v263 = vunpack.c.h.b16 %v41
    %v264 = vunpack.c.l.b16 %v42
    %v265 = vunpack.c.h.b16 %v42
    %v266 = vunpack.c.l.b16 %v43
    %v267 = vunpack.c.h.b16 %v43
    %v268 = vunpack.c.l.b16 %v44
    %v269 = vpack.c.b16 %v262, %v262
    %v270 = vpack.c.b16 %v263, %v263
    %v271 = vpack.c.b16 %v264, %v264
    %v272 = vpack.c.b16 %v265, %v265
    %v273 = vpack.c.b16 %v266, %v266
    %v274 = vpack.c.b16 %v267, %v267
    %v275 = vpack.c.b16 %v268, %v268
    %v478 = vunpack.c.l.b16 %v45
    %v479 = vunpack.c.h.b16 %v45
    %v480 = vunpack.c.l.b16 %v46
    %v481 = vunpack.c.l.b16 %v47
    %v482 = vunpack.c.h.b16 %v47
    %v483 = vunpack.c.l.b16 %v48
    %v484 = vunpack.c.l.b16 %v49
    %v485 = vunpack.c.h.b16 %v49
    %v486 = vunpack.c.l.b16 %v50
    %v487 = vunpack.c.l.b16 %v51
    %v488 = vunpack.c.h.b16 %v51
    %v489 = vunpack.c.l.b16 %v52
    %v490 = vunpack.c.l.b16 %v53
    %v491 = vunpack.c.h.b16 %v53
    %v492 = vunpack.c.l.b16 %v54
    %v493 = vunpack.c.l.b16 %v55
    %v494 = vunpack.c.h.b16 %v55
    %v495 = vunpack.c.l.b16 %v56
    %v496 = vunpack.c.l.b16 %v57
    %v497 = vunpack.c.h.b16 %v57
    %v498 = vunpack.c.l.b16 %v58
    %v499 = vunpack.c.l.b16 %v59
    %v500 = vunpack.c.h.b16 %v59
    %v501 = vunpack.c.l.b16 %v60
    %v502 = vunpack.c.l.b16 %v61
    %v503 = vunpack.c.h.b16 %v61
    %v504 = vunpack.c.l.b16 %v62
    %v505 = vunpack.c.l.b16 %v63
    %v506 = vunpack.c.h.b16 %v63
    %v507 = vunpack.c.l.b16 %v64
    %v508 = vunpack.c.l.b16 %v65
    %v509 = vunpack.c.h.b16 %v65
    %v510 = vunpack.c.l.b16 %v66
    %v511 = vunpack.c.l.b16 %v67
    %v512 = vunpack.c.h.b16 %v67
    %v513 = vunpack.c.l.b16 %v68
    %v514 = vunpack.c.l.b16 %v69
    %v515 = vunpack.c.h.b16 %v69
    %v516 = vunpack.c.l.b16 %v70
    %v517 = vunpack.c.l.b16 %v71
    %v518 = vunpack.c.h.b16 %v71
    %v519 = vunpack.c.l.b16 %v72
    %v520 = vunpack.c.l.b16 %v73
    %v521 = vunpack.c.h.b16 %v73
    %v522 = vunpack.c.l.b16 %v74
    %v523 = vunpack.c.l.b16 %v75
    %v524 = vunpack.c.h.b16 %v75
    %v525 = vunpack.c.l.b16 %v76
    %v526 = vunpack.c.l.b16 %v77
    %v527 = vunpack.c.h.b16 %v77
    %v528 = vunpack.c.l.b16 %v78
    %v529 = vunpack.c.l.b16 %v79
    %v530 = vunpack.c.h.b16 %v79
    %v531 = vunpack.c.l.b16 %v80
    %v532 = vunpack.c.l.b16 %v81
    %v533 = vunpack.c.h.b16 %v81
    %v534 = vunpack.c.l.b16 %v82
    %v535 = vunpack.c.l.b16 %v83
    %v536 = vunpack.c.h.b16 %v83
    %v537 = vunpack.c.l.b16 %v84
    %v538 = vunpack.c.l.b16 %v85
    %v539 = vunpack.c.h.b16 %v85
    %v540 = vunpack.c.l.b16 %v86
    %v541 = vunpack.c.l.b16 %v87
    %v542 = vunpack.c.h.b16 %v87
    %v543 = vunpack.c.l.b16 %v88
    %v544 = vunpack.c.l.b16 %v89
    %v545 = vunpack.c.h.b16 %v89
    %v546 = vunpack.c.l.b16 %v90
    %v547 = vunpack.c.l.b16 %v91
    %v548 = vunpack.c.h.b16 %v91
    %v549 = vunpack.c.l.b16 %v92
    %v550 = vunpack.c.l.b16 %v93
    %v551 = vunpack.c.h.b16 %v93
    %v552 = vunpack.c.l.b16 %v94
    %v553 = vunpack.c.l.b16 %v95
    %v554 = vunpack.c.h.b16 %v95
    %v555 = vunpack.c.l.b16 %v96
    %v556 = vunpack.c.l.b16 %v97
    %v557 = vunpack.c.h.b16 %v97
    %v558 = vunpack.c.l.b16 %v98
    %v559 = vunpack.c.l.b16 %v99
    %v560 = vunpack.c.h.b16 %v99
    %v561 = vunpack.c.l.b16 %v100
    %v562 = vunpack.c.l.b16 %v101
    %v563 = vunpack.c.h.b16 %v101
    %v564 = vunpack.c.l.b16 %v102
    %v565 = vunpack.c.l.b16 %v103
    %v566 = vunpack.c.h.b16 %v103
    %v567 = vunpack.c.l.b16 %v104
    %v568 = vunpack.c.l.b16 %v105
    %v569 = vunpack.c.h.b16 %v105
    %v570 = vunpack.c.l.b16 %v106
    %v571 = vunpack.c.l.b16 %v107
    %v572 = vunpack.c.h.b16 %v107
    %v573 = vunpack.c.l.b16 %v108
    %v574 = vunpack.c.l.b16 %v109
    %v575 = vunpack.c.h.b16 %v109
    %v576 = vunpack.c.l.b16 %v110
    %v577 = vunpack.c.l.b16 %v111
    %v578 = vunpack.c.h.b16 %v111
    %v579 = vunpack.c.l.b16 %v112
    %v580 = vunpack.c.l.b16 %v113
    %v581 = vunpack.c.h.b16 %v113
    %v582 = vunpack.c.l.b16 %v114
    %v583 = vunpack.c.l.b16 %v115
    %v584 = vunpack.c.h.b16 %v115
    %v585 = vunpack.c.l.b16 %v116
    %v586 = vunpack.c.l.b16 %v117
    %v587 = vunpack.c.h.b16 %v117
    %v588 = vunpack.c.l.b16 %v118
    %v589 = vunpack.c.l.b16 %v119
    %v590 = vunpack.c.h.b16 %v119
    %v591 = vunpack.c.l.b16 %v120
    %v592 = vunpack.c.l.b16 %v121
    %v593 = vunpack.c.h.b16 %v121
    %v594 = vunpack.c.l.b16 %v122
    %v595 = vunpack.c.l.b16 %v123
    %v596 = vunpack.c.h.b16 %v123
    %v597 = vunpack.c.l.b16 %v124
    %v598 = vunpack.c.l.b16 %v125
    %v599 = vunpack.c.h.b16 %v125
    %v600 = vunpack.c.l.b16 %v126
    %v601 = vunpack.c.l.b16 %v127
    %v602 = vunpack.c.h.b16 %v127
    %v603 = vunpack.c.l.b16 %v128
    %v604 = vunpack.c.l.b16 %v129
    %v605 = vunpack.c.h.b16 %v129
    %v606 = vunpack.c.l.b16 %v130
    %v607 = vunpack.c.l.b16 %v131
    %v608 = vunpack.c.h.b16 %v131
    %v609 = vunpack.c.l.b16 %v132
    %v610 = vunpack.c.l.b16 %v133
    %v611 = vunpack.c.h.b16 %v133
    %v612 = vunpack.c.l.b16 %v134
    %v613 = vunpack.c.l.b16 %v135
    %v614 = vunpack.c.h.b16 %v135
    %v615 = vunpack.c.l.b16 %v136
    %v616 = vunpack.c.l.b16 %v137
    %v617 = vunpack.c.h.b16 %v137
    %v618 = vunpack.c.l.b16 %v138
    %v619 = vunpack.c.l.b16 %v139
    %v620 = vunpack.c.h.b16 %v139
    %v621 = vunpack.c.l.b16 %v140
    %v622 = vunpack.c.l.b16 %v141
    %v623 = vunpack.c.h.b16 %v141
    %v624 = vunpack.c.l.b16 %v142
    %v625 = vunpack.c.l.b16 %v143
    %v626 = vunpack.c.h.b16 %v143
    %v627 = vunpack.c.l.b16 %v144
    %v628 = vunpack.c.l.b16 %v145
    %v629 = vunpack.c.h.b16 %v145
    %v630 = vunpack.c.l.b16 %v146
    %v631 = vunpack.c.l.b16 %v147
    %v632 = vunpack.c.h.b16 %v147
    %v633 = vunpack.c.l.b16 %v148
    %v634 = vunpack.c.l.b16 %v149
    %v635 = vunpack.c.h.b16 %v149
    %v636 = vunpack.c.l.b16 %v150
    %v637 = vunpack.c.l.b16 %v151
    %v638 = vunpack.c.h.b16 %v151
    %v639 = vunpack.c.l.b16 %v152
    %v640 = vunpack.c.l.b16 %v153
    %v641 = vunpack.c.h.b16 %v153
    %v642 = vunpack.c.l.b16 %v154
    %v643 = vunpack.c.l.b16 %v155
    %v644 = vunpack.c.h.b16 %v155
    %v645 = vunpack.c.l.b16 %v156
    %v646 = vunpack.c.l.b16 %v157
    %v647 = vunpack.c.h.b16 %v157
    %v648 = vunpack.c.l.b16 %v158
    %v649 = vunpack.c.l.b16 %v159
    %v650 = vunpack.c.h.b16 %v159
    %v651 = vunpack.c.l.b16 %v160
    %v652 = vunpack.c.l.b16 %v161
    %v653 = vunpack.c.h.b16 %v161
    %v654 = vunpack.c.l.b16 %v162
    %v655 = vunpack.c.l.b16 %v163
    %v656 = vunpack.c.h.b16 %v163
    %v657 = vunpack.c.l.b16 %v164
    %v658 = vunpack.c.l.b16 %v165
    %v659 = vunpack.c.h.b16 %v165
    %v660 = vunpack.c.l.b16 %v166
    %v661 = vunpack.c.l.b16 %v167
    %v662 = vunpack.c.h.b16 %v167
    %v663 = vunpack.c.l.b16 %v168
    %v664 = vunpack.c.l.b16 %v169
    %v665 = vunpack.c.h.b16 %v169
    %v666 = vunpack.c.l.b16 %v170
    %v667 = vunpack.c.l.b16 %v171
    %v668 = vunpack.c.h.b16 %v171
    %v669 = vunpack.c.l.b16 %v172
    %v670 = vunpack.c.l.b16 %v173
    %v671 = vunpack.c.h.b16 %v173
    %v672 = vunpack.c.l.b16 %v174
    %v673 = vunpack.c.l.b16 %v175
    %v674 = vunpack.c.h.b16 %v175
    %v675 = vunpack.c.l.b16 %v176
    %v676 = vunpack.c.l.b16 %v177
    %v677 = vunpack.c.h.b16 %v177
    %v678 = vunpack.c.l.b16 %v178
    %v679 = vunpack.c.l.b16 %v179
    %v680 = vunpack.c.h.b16 %v179
    %v681 = vunpack.c.l.b16 %v180
    %v682 = vunpack.c.l.b16 %v181
    %v683 = vunpack.c.h.b16 %v181
    %v684 = vunpack.c.l.b16 %v182
    %v685 = vunpack.c.l.b16 %v183
    %v686 = vunpack.c.h.b16 %v183
    %v687 = vunpack.c.l.b16 %v184
    %v688 = vunpack.c.l.b16 %v185
    %v689 = vunpack.c.h.b16 %v185
    %v690 = vunpack.c.l.b16 %v186
    %v691 = vunpack.c.l.b16 %v187
    %v692 = vunpack.c.h.b16 %v187
    %v693 = vunpack.c.l.b16 %v188
    %v694 = vunpack.c.l.b16 %v189
    %v695 = vunpack.c.h.b16 %v189
    %v696 = vunpack.c.l.b16 %v190
    %v697 = vunpack.c.l.b16 %v191
    %v698 = vunpack.c.h.b16 %v191
    %v699 = vunpack.c.l.b16 %v192
    %v700 = vunpack.c.l.b16 %v193
    %v701 = vunpack.c.h.b16 %v193
    %v702 = vunpack.c.l.b16 %v194
    %v703 = vunpack.c.l.b16 %v195
    %v704 = vunpack.c.h.b16 %v195
    %v705 = vunpack.c.l.b16 %v196
    %v706 = vunpack.c.l.b16 %v197
    %v707 = vunpack.c.h.b16 %v197
    %v708 = vunpack.c.l.b16 %v198
    %v709 = vunpack.c.l.b16 %v199
    %v710 = vunpack.c.h.b16 %v199
    %v711 = vunpack.c.l.b16 %v200
    %v712 = vunpack.c.l.b16 %v201
    %v713 = vunpack.c.h.b16 %v201
    %v714 = vunpack.c.l.b16 %v202
    %v715 = vunpack.c.l.b16 %v203
    %v716 = vunpack.c.h.b16 %v203
    %v717 = vunpack.c.l.b16 %v204
    %v718 = vunpack.c.l.b16 %v205
    %v719 = vunpack.c.h.b16 %v205
    %v720 = vunpack.c.l.b16 %v206
    %v721 = vunpack.c.l.b16 %v207
    %v722 = vunpack.c.h.b16 %v207
    %v723 = vunpack.c.l.b16 %v208
    %v724 = vunpack.c.l.b16 %v209
    %v725 = vunpack.c.h.b16 %v209
    %v726 = vunpack.c.l.b16 %v210
    %v727 = vunpack.c.l.b16 %v211
    %v728 = vunpack.c.h.b16 %v211
    %v729 = vunpack.c.l.b16 %v212
    %v730 = vunpack.c.l.b16 %v213
    %v731 = vunpack.c.h.b16 %v213
    %v732 = vunpack.c.l.b16 %v214
    %v733 = vunpack.c.l.b16 %v215
    %v734 = vunpack.c.h.b16 %v215
    %v735 = vunpack.c.l.b16 %v216
    %v736 = vunpack.c.l.b16 %v217
    %v737 = vunpack.c.h.b16 %v217
    %v738 = vunpack.c.l.b16 %v218
    %v739 = vunpack.c.l.b16 %v219
    %v740 = vunpack.c.h.b16 %v219
    %v741 = vunpack.c.l.b16 %v220
    %v742 = vunpack.c.l.b16 %v221
    %v743 = vunpack.c.h.b16 %v221
    %v744 = vunpack.c.l.b16 %v222
    %v745 = vunpack.c.l.b16 %v223
    %v746 = vunpack.c.h.b16 %v223
    %v747 = vunpack.c.l.b16 %v224
    %v748 = vunpack.c.l.b16 %v225
    %v749 = vunpack.c.h.b16 %v225
    %v750 = vunpack.c.l.b16 %v226
    %v751 = vunpack.c.l.b16 %v227
    %v752 = vunpack.c.h.b16 %v227
    %v753 = vunpack.c.l.b16 %v228
    %v754 = vunpack.c.l.b16 %v229
    %v755 = vunpack.c.h.b16 %v229
    %v756 = vunpack.c.l.b16 %v230
    %v757 = vunpack.c.l.b16 %v231
    %v758 = vunpack.c.h.b16 %v231
    %v759 = vunpack.c.l.b16 %v232
    %v760 = vunpack.c.l.b16 %v233
    %v761 = vunpack.c.h.b16 %v233
    %v762 = vunpack.c.l.b16 %v234
    %v763 = vunpack.c.l.b16 %v235
    %v764 = vunpack.c.h.b16 %v235
    %v765 = vunpack.c.l.b16 %v236
    %v766 = vunpack.c.l.b16 %v237
    %v767 = vunpack.c.h.b16 %v237
    %v768 = vunpack.c.l.b16 %v238
    %v769 = vunpack.c.l.b16 %v239
    %v770 = vunpack.c.h.b16 %v239
    %v771 = vunpack.c.l.b16 %v240
    %v772 = vpack.c.b16 %v481, %v478
    %v773 = vpack.c.b16 %v482, %v479
    %v774 = vpack.c.b16 %v483, %v480
    %v775 = vpack.c.b16 %v487, %v484
    %v776 = vpack.c.b16 %v488, %v485
    %v777 = vpack.c.b16 %v489, %v486
    %v778 = vpack.c.b16 %v493, %v490
    %v779 = vpack.c.b16 %v494, %v491
    %v780 = vpack.c.b16 %v495, %v492
    %v781 = vpack.c.b16 %v499, %v496
    %v782 = vpack.c.b16 %v500, %v497
    %v783 = vpack.c.b16 %v501, %v498
    %v784 = vpack.c.b16 %v505, %v502
    %v785 = vpack.c.b16 %v506, %v503
    %v786 = vpack.c.b16 %v507, %v504
    %v787 = vpack.c.b16 %v511, %v508
    %v788 = vpack.c.b16 %v512, %v509
    %v789 = vpack.c.b16 %v513, %v510
    %v790 = vpack.c.b16 %v517, %v514
    %v791 = vpack.c.b16 %v518, %v515
    %v792 = vpack.c.b16 %v519, %v516
    %v793 = vpack.c.b16 %v523, %v520
    %v794 = vpack.c.b16 %v524, %v521
    %v795 = vpack.c.b16 %v525, %v522
    %v796 = vpack.c.b16 %v529, %v526
    %v797 = vpack.c.b16 %v530, %v527
    %v798 = vpack.c.b16 %v531, %v528
    %v799 = vpack.c.b16 %v535, %v532
    %v800 = vpack.c.b16 %v536, %v533
    %v801 = vpack.c.b16 %v537, %v534
    %v802 = vpack.c.b16 %v541, %v538
    %v803 = vpack.c.b16 %v542, %v539
    %v804 = vpack.c.b16 %v543, %v540
    %v805 = vpack.c.b16 %v547, %v544
    %v806 = vpack.c.b16 %v548, %v545
    %v807 = vpack.c.b16 %v549, %v546
    %v808 = vpack.c.b16 %v553, %v550
    %v809 = vpack.c.b16 %v554, %v551
    %v810 = vpack.c.b16 %v555, %v552
    %v811 = vpack.c.b16 %v559, %v556
    %v812 = vpack.c.b16 %v560, %v557
    %v813 = vpack.c.b16 %v561, %v558
    %v814 = vpack.c.b16 %v565, %v562
    %v815 = vpack.c.b16 %v566, %v563
    %v816 = vpack.c.b16 %v567, %v564
    %v817 = vpack.c.b16 %v571, %v568
    %v818 = vpack.c.b16 %v572, %v569
    %v819 = vpack.c.b16 %v573, %v570
    %v820 = vpack.c.b16 %v577, %v574
    %v821 = vpack.c.b16 %v578, %v575
    %v822 = vpack.c.b16 %v579, %v576
    %v823 = vpack.c.b16 %v583, %v580
    %v824 = vpack.c.b16 %v584, %v581
    %v825 = vpack.c.b16 %v585, %v582
    %v826 = vpack.c.b16 %v589, %v586
    %v827 = vpack.c.b16 %v590, %v587
    %v828 = vpack.c.b16 %v591, %v588
    %v829 = vpack.c.b16 %v595, %v592
    %v830 = vpack.c.b16 %v596, %v593
    %v831 = vpack.c.b16 %v597, %v594
    %v832 = vpack.c.b16 %v601, %v598
    %v833 = vpack.c.b16 %v602, %v599
    %v834 = vpack.c.b16 %v603, %v600
    %v835 = vpack.c.b16 %v607, %v604
    %v836 = vpack.c.b16 %v608, %v605
    %v837 = vpack.c.b16 %v609, %v606
    %v838 = vpack.c.b16 %v613, %v610
    %v839 = vpack.c.b16 %v614, %v611
    %v840 = vpack.c.b16 %v615, %v612
    %v841 = vpack.c.b16 %v619, %v616
    %v842 = vpack.c.b16 %v620, %v617
    %v843 = vpack.c.b16 %v621, %v618
    %v844 = vpack.c.b16 %v625, %v622
    %v845 = vpack.c.b16 %v626, %v623
    %v846 = vpack.c.b16 %v627, %v624
    %v847 = vpack.c.b16 %v631, %v628
    %v848 = vpack.c.b16 %v632, %v629
    %v849 = vpack.c.b16 %v633, %v630
    %v850 = vpack.c.b16 %v637, %v634
    %v851 = vpack.c.b16 %v638, %v635
    %v852 = vpack.c.b16 %v639, %v636
    %v853 = vpack.c.b16 %v643, %v640
    %v854 = vpack.c.b16 %v644, %v641
    %v855 = vpack.c.b16 %v645, %v642
    %v856 = vpack.c.b16 %v649, %v646
    %v857 = vpack.c.b16 %v650, %v647
    %v858 = vpack.c.b16 %v651, %v648
    %v859 = vpack.c.b16 %v655, %v652
    %v860 = vpack.c.b16 %v656, %v653
    %v861 = vpack.c.b16 %v657, %v654
    %v862 = vpack.c.b16 %v661, %v658
    %v863 = vpack.c.b16 %v662, %v659
    %v864 = vpack.c.b16 %v663, %v660
    %v865 = vpack.c.b16 %v667, %v664
    %v866 = vpack.c.b16 %v668, %v665
    %v867 = vpack.c.b16 %v669, %v666
    %v868 = vpack.c.b16 %v673, %v670
    %v869 = vpack.c.b16 %v674, %v671
    %v870 = vpack.c.b16 %v675, %v672
    %v871 = vpack.c.b16 %v679, %v676
    %v872 = vpack.c.b16 %v680, %v677
    %v873 = vpack.c.b16 %v681, %v678
    %v874 = vpack.c.b16 %v685, %v682
    %v875 = vpack.c.b16 %v686, %v683
    %v876 = vpack.c.b16 %v687, %v684
    %v877 = vpack.c.b16 %v691, %v688
    %v878 = vpack.c.b16 %v692, %v689
    %v879 = vpack.c.b16 %v693, %v690
    %v880 = vpack.c.b16 %v697, %v694
    %v881 = vpack.c.b16 %v698, %v695
    %v882 = vpack.c.b16 %v699, %v696
    %v883 = vpack.c.b16 %v703, %v700
    %v884 = vpack.c.b16 %v704, %v701
    %v885 = vpack.c.b16 %v705, %v702
    %v886 = vpack.c.b16 %v709, %v706
    %v887 = vpack.c.b16 %v710, %v707
    %v888 = vpack.c.b16 %v711, %v708
    %v889 = vpack.c.b16 %v715, %v712
    %v890 = vpack.c.b16 %v716, %v713
    %v891 = vpack.c.b16 %v717, %v714
    %v892 = vpack.c.b16 %v721, %v718
    %v893 = vpack.c.b16 %v722, %v719
    %v894 = vpack.c.b16 %v723, %v720
    %v895 = vpack.c.b16 %v727, %v724
    %v896 = vpack.c.b16 %v728, %v725
    %v897 = vpack.c.b16 %v729, %v726
    %v898 = vpack.c.b16 %v733, %v730
    %v899 = vpack.c.b16 %v734, %v731
    %v900 = vpack.c.b16 %v735, %v732
    %v901 = vpack.c.b16 %v739, %v736
    %v902 = vpack.c.b16 %v740, %v737
    %v903 = vpack.c.b16 %v741, %v738
    %v904 = vpack.c.b16 %v745, %v742
    %v905 = vpack.c.b16 %v746, %v743
    %v906 = vpack.c.b16 %v747, %v744
    %v907 = vpack.c.b16 %v751, %v748
    %v908 = vpack.c.b16 %v752, %v749
    %v909 = vpack.c.b16 %v753, %v750
    %v910 = vpack.c.b16 %v757, %v754
    %v911 = vpack.c.b16 %v758, %v755
    %v912 = vpack.c.b16 %v759, %v756
    %v913 = vpack.c.b16 %v763, %v760
    %v914 = vpack.c.b16 %v764, %v761
    %v915 = vpack.c.b16 %v765, %v762
    %v916 = vpack.c.b16 %v769, %v766
    %v917 = vpack.c.b16 %v770, %v767
    %v918 = vpack.c.b16 %v771, %v768
    %vm1066 = vcmask 130048
    %v1068 = vsel %vm1066, %v275, 0
    %1070 = vmatprep.subr.bf16.mxu0 %v773
    %1071 = vmatpush1.bf16.msra.mxu0 %v772
    %1072 = vmatprep.subr.bf16.mxu0 %v776
    %1073 = vmatpush1.bf16.msra.mxu0 %v775
    %1074 = vmatprep.subr.bf16.mxu0 %v779
    %1075 = vmatpush1.bf16.msra.mxu0 %v778
    %1076 = vmatprep.subr.bf16.mxu0 %v782
    %1077 = vmatpush1.bf16.msra.mxu0 %v781
    %1078 = vmatprep.subr.bf16.mxu0 %v785
    %1079 = vmatpush1.bf16.msra.mxu0 %v784
    %1080 = vmatprep.subr.bf16.mxu0 %v788
    %1081 = vmatpush1.bf16.msra.mxu0 %v787
    %1082 = vmatprep.subr.bf16.mxu0 %v791
    %1083 = vmatpush1.bf16.msra.mxu0 %v790
    %1084 = vmatprep.subr.bf16.mxu0 %v794
    %1085 = vmatpush1.bf16.msra.mxu0 %v793
    %1086 = vmatprep.subr.bf16.mxu0 %v797
    %1087 = vmatpush1.bf16.msra.mxu0 %v796
    %1088 = vmatprep.subr.bf16.mxu0 %v800
    %1089 = vmatpush1.bf16.msra.mxu0 %v799
    %1090 = vmatprep.subr.bf16.mxu0 %v803
    %1091 = vmatpush1.bf16.msra.mxu0 %v802
    %1092 = vmatprep.subr.bf16.mxu0 %v806
    %1093 = vmatpush1.bf16.msra.mxu0 %v805
    %1094 = vmatprep.subr.bf16.mxu0 %v809
    %1095 = vmatpush1.bf16.msra.mxu0 %v808
    %1096 = vmatprep.subr.bf16.mxu0 %v812
    %1097 = vmatpush1.bf16.msra.mxu0 %v811
    %1098 = vmatprep.subr.bf16.mxu0 %v815
    %1099 = vmatpush1.bf16.msra.mxu0 %v814
    %1100 = vmatprep.subr.bf16.mxu0 %v818
    %1101 = vmatpush1.bf16.msra.mxu0 %v817
    %1102 = vmatprep.mubr.bf16.mxu0 %v270
    %1103 = vmatmul.mubr.bf16.gmra.mrb[0].mxu0 %v269
    %v1104 = vpop.f32.mrb[0].mxu0
    %v1105 = vadd.f32 %v246, %v1104
    %v1106 = vpop.f32.mrb[0].mxu0
    %v1107 = vadd.f32 %v250, %v1106
    %v1108 = vpop.f32.mrb[0].mxu0
    %v1109 = vpop.f32.mrb[0].mxu0
    %1110 = vdwg.mxu0
    %1111 = vmatprep.subr.bf16.mxu0 %v821
    %1112 = vmatpush1.bf16.msra.mxu0 %v820
    %1113 = vmatprep.subr.bf16.mxu0 %v824
    %1114 = vmatpush1.bf16.msra.mxu0 %v823
    %1115 = vmatprep.subr.bf16.mxu0 %v827
    %1116 = vmatpush1.bf16.msra.mxu0 %v826
    %1117 = vmatprep.subr.bf16.mxu0 %v830
    %1118 = vmatpush1.bf16.msra.mxu0 %v829
    %1119 = vmatprep.subr.bf16.mxu0 %v833
    %1120 = vmatpush1.bf16.msra.mxu0 %v832
    %1121 = vmatprep.subr.bf16.mxu0 %v836
    %1122 = vmatpush1.bf16.msra.mxu0 %v835
    %1123 = vmatprep.subr.bf16.mxu0 %v839
    %1124 = vmatpush1.bf16.msra.mxu0 %v838
    %1125 = vmatprep.subr.bf16.mxu0 %v842
    %1126 = vmatpush1.bf16.msra.mxu0 %v841
    %1127 = vmatprep.subr.bf16.mxu0 %v845
    %1128 = vmatpush1.bf16.msra.mxu0 %v844
    %1129 = vmatprep.subr.bf16.mxu0 %v848
    %1130 = vmatpush1.bf16.msra.mxu0 %v847
    %1131 = vmatprep.subr.bf16.mxu0 %v851
    %1132 = vmatpush1.bf16.msra.mxu0 %v850
    %1133 = vmatprep.subr.bf16.mxu0 %v854
    %1134 = vmatpush1.bf16.msra.mxu0 %v853
    %1135 = vmatprep.subr.bf16.mxu0 %v857
    %1136 = vmatpush1.bf16.msra.mxu0 %v856
    %1137 = vmatprep.subr.bf16.mxu0 %v860
    %1138 = vmatpush1.bf16.msra.mxu0 %v859
    %1139 = vmatprep.subr.bf16.mxu0 %v863
    %1140 = vmatpush1.bf16.msra.mxu0 %v862
    %1141 = vmatprep.subr.bf16.mxu0 %v866
    %1142 = vmatpush1.bf16.msra.mxu0 %v865
    %1143 = vmatprep.mubr.bf16.mxu0 %v272
    %1144 = vmatmul.mubr.bf16.gmra.mrb[0].mxu0 %v271
    %v1145 = vpop.f32.mrb[0].mxu0
    %v1146 = vadd.f32 %v1105, %v1145
    %v1147 = vpop.f32.mrb[0].mxu0
    %v1148 = vadd.f32 %v1107, %v1147
    %v1149 = vpop.f32.mrb[0].mxu0
    %v1150 = vpop.f32.mrb[0].mxu0
    %1151 = vdwg.mxu0
    %1152 = vmatprep.subr.bf16.mxu0 %v869
    %1153 = vmatpush1.bf16.msra.mxu0 %v868
    %1154 = vmatprep.subr.bf16.mxu0 %v872
    %1155 = vmatpush1.bf16.msra.mxu0 %v871
    %1156 = vmatprep.subr.bf16.mxu0 %v875
    %1157 = vmatpush1.bf16.msra.mxu0 %v874
    %1158 = vmatprep.subr.bf16.mxu0 %v878
    %1159 = vmatpush1.bf16.msra.mxu0 %v877
    %1160 = vmatprep.subr.bf16.mxu0 %v881
    %1161 = vmatpush1.bf16.msra.mxu0 %v880
    %1162 = vmatprep.subr.bf16.mxu0 %v884
    %1163 = vmatpush1.bf16.msra.mxu0 %v883
    %1164 = vmatprep.subr.bf16.mxu0 %v887
    %1165 = vmatpush1.bf16.msra.mxu0 %v886
    %1166 = vmatprep.subr.bf16.mxu0 %v890
    %1167 = vmatpush1.bf16.msra.mxu0 %v889
    %1168 = vmatprep.subr.bf16.mxu0 %v893
    %1169 = vmatpush1.bf16.msra.mxu0 %v892
    %1170 = vmatprep.subr.bf16.mxu0 %v896
    %1171 = vmatpush1.bf16.msra.mxu0 %v895
    %1172 = vmatprep.subr.bf16.mxu0 %v899
    %1173 = vmatpush1.bf16.msra.mxu0 %v898
    %1174 = vmatprep.subr.bf16.mxu0 %v902
    %1175 = vmatpush1.bf16.msra.mxu0 %v901
    %1176 = vmatprep.subr.bf16.mxu0 %v905
    %1177 = vmatpush1.bf16.msra.mxu0 %v904
    %1178 = vmatprep.subr.bf16.mxu0 %v908
    %1179 = vmatpush1.bf16.msra.mxu0 %v907
    %1180 = vmatprep.subr.bf16.mxu0 %v911
    %1181 = vmatpush1.bf16.msra.mxu0 %v910
    %1182 = vmatprep.subr.bf16.mxu0 %v914
    %1183 = vmatpush1.bf16.msra.mxu0 %v913
    %1184 = vmatprep.mubr.bf16.mxu0 %v274
    %1185 = vmatmul.mubr.bf16.gmra.mrb[0].mxu0 %v273
    %v1186 = vpop.f32.mrb[0].mxu0
    %v1187 = vadd.f32 %v1146, %v1186
    %v1188 = vpop.f32.mrb[0].mxu0
    %v1189 = vadd.f32 %v1148, %v1188
    %v1190 = vpop.f32.mrb[0].mxu0
    %v1191 = vpop.f32.mrb[0].mxu0
    %1192 = vdwg.mxu0
    %1193 = vmatprep.subr.bf16.mxu0 %v917
    %1194 = vmatpush1.bf16.msra.mxu0 %v916
    %1195 = vmatprep.subr.bf16.mxu0 0
    %1196 = vmatpush1.bf16.msra.mxu0 0
    %1197 = vmatprep.subr.bf16.mxu0 0
    %1198 = vmatpush1.bf16.msra.mxu0 0
    %1199 = vmatprep.subr.bf16.mxu0 0
    %1200 = vmatpush1.bf16.msra.mxu0 0
    %1201 = vmatprep.subr.bf16.mxu0 0
    %1202 = vmatpush1.bf16.msra.mxu0 0
    %1203 = vmatprep.subr.bf16.mxu0 0
    %1204 = vmatpush1.bf16.msra.mxu0 0
    %1205 = vmatprep.subr.bf16.mxu0 0
    %1206 = vmatpush1.bf16.msra.mxu0 0
    %1207 = vmatprep.subr.bf16.mxu0 0
    %1208 = vmatpush1.bf16.msra.mxu0 0
    %1209 = vmatprep.subr.bf16.mxu0 0
    %1210 = vmatpush1.bf16.msra.mxu0 0
    %1211 = vmatprep.subr.bf16.mxu0 0
    %1212 = vmatpush1.bf16.msra.mxu0 0
    %1213 = vmatprep.subr.bf16.mxu0 0
    %1214 = vmatpush1.bf16.msra.mxu0 0
    %1215 = vmatprep.subr.bf16.mxu0 0
    %1216 = vmatpush1.bf16.msra.mxu0 0
    %1217 = vmatprep.subr.bf16.mxu0 0
    %1218 = vmatpush1.bf16.msra.mxu0 0
    %1219 = vmatprep.subr.bf16.mxu0 0
    %1220 = vmatpush1.bf16.msra.mxu0 0
    %1221 = vmatprep.subr.bf16.mxu0 0
    %1222 = vmatpush1.bf16.msra.mxu0 0
    %1223 = vmatprep.subr.bf16.mxu0 0
    %1224 = vmatpush1.bf16.msra.mxu0 0
    %1225 = vmatprep.mubr.bf16.mxu0 0
    %1226 = vmatmul.mubr.bf16.gmra.mrb[0].mxu0 %v1068
    %v1227 = vpop.f32.mrb[0].mxu0
    %v1228 = vadd.f32 %v1187, %v1227
    %v1229 = vpop.f32.mrb[0].mxu0
    %v1230 = vadd.f32 %v1189, %v1229
    %v1231 = vpop.f32.mrb[0].mxu0
    %v1232 = vpop.f32.mrb[0].mxu0
    %1233 = vdwg.mxu0
    %1234 = vmatprep.subr.bf16.mxu0 0
    %1235 = vmatpush1.bf16.msra.mxu0 %v774
    %1236 = vmatprep.subr.bf16.mxu0 0
    %1237 = vmatpush1.bf16.msra.mxu0 %v777
    %1238 = vmatprep.subr.bf16.mxu0 0
    %1239 = vmatpush1.bf16.msra.mxu0 %v780
    %1240 = vmatprep.subr.bf16.mxu0 0
    %1241 = vmatpush1.bf16.msra.mxu0 %v783
    %1242 = vmatprep.subr.bf16.mxu0 0
    %1243 = vmatpush1.bf16.msra.mxu0 %v786
    %1244 = vmatprep.subr.bf16.mxu0 0
    %1245 = vmatpush1.bf16.msra.mxu0 %v789
    %1246 = vmatprep.subr.bf16.mxu0 0
    %1247 = vmatpush1.bf16.msra.mxu0 %v792
    %1248 = vmatprep.subr.bf16.mxu0 0
    %1249 = vmatpush1.bf16.msra.mxu0 %v795
    %1250 = vmatprep.subr.bf16.mxu0 0
    %1251 = vmatpush1.bf16.msra.mxu0 %v798
    %1252 = vmatprep.subr.bf16.mxu0 0
    %1253 = vmatpush1.bf16.msra.mxu0 %v801
    %1254 = vmatprep.subr.bf16.mxu0 0
    %1255 = vmatpush1.bf16.msra.mxu0 %v804
    %1256 = vmatprep.subr.bf16.mxu0 0
    %1257 = vmatpush1.bf16.msra.mxu0 %v807
    %1258 = vmatprep.subr.bf16.mxu0 0
    %1259 = vmatpush1.bf16.msra.mxu0 %v810
    %1260 = vmatprep.subr.bf16.mxu0 0
    %1261 = vmatpush1.bf16.msra.mxu0 %v813
    %1262 = vmatprep.subr.bf16.mxu0 0
    %1263 = vmatpush1.bf16.msra.mxu0 %v816
    %1264 = vmatprep.subr.bf16.mxu0 0
    %1265 = vmatpush1.bf16.msra.mxu0 %v819
    %1266 = vmatprep.mubr.bf16.mxu0 %v270
    %1267 = vmatmul.mubr.bf16.gmra.mrb[0].mxu0 %v269
    %v1268 = vpop.f32.mrb[0].mxu0
    %v1269 = vadd.f32 %v254, %v1268
    %v1270 = vpop.f32.mrb[0].mxu0
    %v1271 = vpop.f32.mrb[0].mxu0
    %v1272 = vpop.f32.mrb[0].mxu0
    %1273 = vdwg.mxu0
    %1274 = vmatprep.subr.bf16.mxu0 0
    %1275 = vmatpush1.bf16.msra.mxu0 %v822
    %1276 = vmatprep.subr.bf16.mxu0 0
    %1277 = vmatpush1.bf16.msra.mxu0 %v825
    %1278 = vmatprep.subr.bf16.mxu0 0
    %1279 = vmatpush1.bf16.msra.mxu0 %v828
    %1280 = vmatprep.subr.bf16.mxu0 0
    %1281 = vmatpush1.bf16.msra.mxu0 %v831
    %1282 = vmatprep.subr.bf16.mxu0 0
    %1283 = vmatpush1.bf16.msra.mxu0 %v834
    %1284 = vmatprep.subr.bf16.mxu0 0
    %1285 = vmatpush1.bf16.msra.mxu0 %v837
    %1286 = vmatprep.subr.bf16.mxu0 0
    %1287 = vmatpush1.bf16.msra.mxu0 %v840
    %1288 = vmatprep.subr.bf16.mxu0 0
    %1289 = vmatpush1.bf16.msra.mxu0 %v843
    %1290 = vmatprep.subr.bf16.mxu0 0
    %1291 = vmatpush1.bf16.msra.mxu0 %v846
    %1292 = vmatprep.subr.bf16.mxu0 0
    %1293 = vmatpush1.bf16.msra.mxu0 %v849
    %1294 = vmatprep.subr.bf16.mxu0 0
    %1295 = vmatpush1.bf16.msra.mxu0 %v852
    %1296 = vmatprep.subr.bf16.mxu0 0
    %1297 = vmatpush1.bf16.msra.mxu0 %v855
    %1298 = vmatprep.subr.bf16.mxu0 0
    %1299 = vmatpush1.bf16.msra.mxu0 %v858
    %1300 = vmatprep.subr.bf16.mxu0 0
    %1301 = vmatpush1.bf16.msra.mxu0 %v861
    %1302 = vmatprep.subr.bf16.mxu0 0
    %1303 = vmatpush1.bf16.msra.mxu0 %v864
    %1304 = vmatprep.subr.bf16.mxu0 0
    %1305 = vmatpush1.bf16.msra.mxu0 %v867
    %1306 = vmatprep.mubr.bf16.mxu0 %v272
    %1307 = vmatmul.mubr.bf16.gmra.mrb[0].mxu0 %v271
    %v1308 = vpop.f32.mrb[0].mxu0
    %v1309 = vadd.f32 %v1269, %v1308
    %v1310 = vpop.f32.mrb[0].mxu0
    %v1311 = vpop.f32.mrb[0].mxu0
    %v1312 = vpop.f32.mrb[0].mxu0
    %1313 = vdwg.mxu0
    %1314 = vmatprep.subr.bf16.mxu0 0
    %1315 = vmatpush1.bf16.msra.mxu0 %v870
    %1316 = vmatprep.subr.bf16.mxu0 0
    %1317 = vmatpush1.bf16.msra.mxu0 %v873
    %1318 = vmatprep.subr.bf16.mxu0 0
    %1319 = vmatpush1.bf16.msra.mxu0 %v876
    %1320 = vmatprep.subr.bf16.mxu0 0
    %1321 = vmatpush1.bf16.msra.mxu0 %v879
    %1322 = vmatprep.subr.bf16.mxu0 0
    %1323 = vmatpush1.bf16.msra.mxu0 %v882
    %1324 = vmatprep.subr.bf16.mxu0 0
    %1325 = vmatpush1.bf16.msra.mxu0 %v885
    %1326 = vmatprep.subr.bf16.mxu0 0
    %1327 = vmatpush1.bf16.msra.mxu0 %v888
    %1328 = vmatprep.subr.bf16.mxu0 0
    %1329 = vmatpush1.bf16.msra.mxu0 %v891
    %1330 = vmatprep.subr.bf16.mxu0 0
    %1331 = vmatpush1.bf16.msra.mxu0 %v894
    %1332 = vmatprep.subr.bf16.mxu0 0
    %1333 = vmatpush1.bf16.msra.mxu0 %v897
    %1334 = vmatprep.subr.bf16.mxu0 0
    %1335 = vmatpush1.bf16.msra.mxu0 %v900
    %1336 = vmatprep.subr.bf16.mxu0 0
    %1337 = vmatpush1.bf16.msra.mxu0 %v903
    %1338 = vmatprep.subr.bf16.mxu0 0
    %1339 = vmatpush1.bf16.msra.mxu0 %v906
    %1340 = vmatprep.subr.bf16.mxu0 0
    %1341 = vmatpush1.bf16.msra.mxu0 %v909
    %1342 = vmatprep.subr.bf16.mxu0 0
    %1343 = vmatpush1.bf16.msra.mxu0 %v912
    %1344 = vmatprep.subr.bf16.mxu0 0
    %1345 = vmatpush1.bf16.msra.mxu0 %v915
    %1346 = vmatprep.mubr.bf16.mxu0 %v274
    %1347 = vmatmul.mubr.bf16.gmra.mrb[0].mxu0 %v273
    %v1348 = vpop.f32.mrb[0].mxu0
    %v1349 = vadd.f32 %v1309, %v1348
    %v1350 = vpop.f32.mrb[0].mxu0
    %v1351 = vpop.f32.mrb[0].mxu0
    %v1352 = vpop.f32.mrb[0].mxu0
    %1353 = vdwg.mxu0
    %1354 = vmatprep.subr.bf16.mxu0 0
    %1355 = vmatpush1.bf16.msra.mxu0 %v918
    %1356 = vmatprep.subr.bf16.mxu0 0
    %1357 = vmatpush1.bf16.msra.mxu0 0
    %1358 = vmatprep.subr.bf16.mxu0 0
    %1359 = vmatpush1.bf16.msra.mxu0 0
    %1360 = vmatprep.subr.bf16.mxu0 0
    %1361 = vmatpush1.bf16.msra.mxu0 0
    %1362 = vmatprep.subr.bf16.mxu0 0
    %1363 = vmatpush1.bf16.msra.mxu0 0
    %1364 = vmatprep.subr.bf16.mxu0 0
    %1365 = vmatpush1.bf16.msra.mxu0 0
    %1366 = vmatprep.subr.bf16.mxu0 0
    %1367 = vmatpush1.bf16.msra.mxu0 0
    %1368 = vmatprep.subr.bf16.mxu0 0
    %1369 = vmatpush1.bf16.msra.mxu0 0
    %1370 = vmatprep.subr.bf16.mxu0 0
    %1371 = vmatpush1.bf16.msra.mxu0 0
    %1372 = vmatprep.subr.bf16.mxu0 0
    %1373 = vmatpush1.bf16.msra.mxu0 0
    %1374 = vmatprep.subr.bf16.mxu0 0
    %1375 = vmatpush1.bf16.msra.mxu0 0
    %1376 = vmatprep.subr.bf16.mxu0 0
    %1377 = vmatpush1.bf16.msra.mxu0 0
    %1378 = vmatprep.subr.bf16.mxu0 0
    %1379 = vmatpush1.bf16.msra.mxu0 0
    %1380 = vmatprep.subr.bf16.mxu0 0
    %1381 = vmatpush1.bf16.msra.mxu0 0
    %1382 = vmatprep.subr.bf16.mxu0 0
    %1383 = vmatpush1.bf16.msra.mxu0 0
    %1384 = vmatprep.subr.bf16.mxu0 0
    %1385 = vmatpush1.bf16.msra.mxu0 0
    %1386 = vmatprep.mubr.bf16.mxu0 0
    %1387 = vmatmul.mubr.bf16.gmra.mrb[0].mxu0 %v1068
    %v1388 = vpop.f32.mrb[0].mxu0
    %v1389 = vadd.f32 %v1349, %v1388
    %v1390 = vpop.f32.mrb[0].mxu0
    %v1391 = vpop.f32.mrb[0].mxu0
    %v1392 = vpop.f32.mrb[0].mxu0
    %1393 = vdwg.mxu0
    %v1394 = vmax.f32 %v1228, 0.0
    %v1395 = vmax.f32 %v1230, 0.0
    %v1396 = vmax.f32 %v1389, 0.0
    %v1397 = vpack.c.bf16 %v1394, %v1394
    %v1398 = vpack.c.bf16 %v1395, %v1395
    %v1399 = vpack.c.bf16 %v1396, %v1396
    %v1400 = vld [vmem:[%s3] sm:$0xf]
    %v1401 = vld [vmem:[%s3 + $0x4] sm:$0xf]
    %v1402 = vld [vmem:[%s3 + $0x8] sm:$0xf]
    %v1403 = vld [vmem:[%s3 + $0xc] sm:$0xf]
    %v1404 = vld [vmem:[%s3 + $0x10] sm:$0xf]
    %v1405 = vld [vmem:[%s3 + $0x14] sm:$0xf]
    %v1406 = vld [vmem:[%s3 + $0x18] sm:$0xf]
    %v1407 = vld [vmem:[%s3 + $0x1c] sm:$0xf]
    %v1408 = vld [vmem:[%s3 + $0x20] sm:$0xf]
    %v1409 = vld [vmem:[%s3 + $0x24] sm:$0xf]
    %v1410 = vld [vmem:[%s3 + $0x28] sm:$0xf]
    %v1411 = vld [vmem:[%s3 + $0x2c] sm:$0xf]
    %v1412 = vld [vmem:[%s3 + $0x30] sm:$0xf]
    %v1413 = vld [vmem:[%s3 + $0x34] sm:$0xf]
    %v1414 = vld [vmem:[%s3 + $0x38] sm:$0xf]
    %v1415 = vld [vmem:[%s3 + $0x3c] sm:$0xf]
    %v1416 = vld [vmem:[%s3 + $0x40] sm:$0xf]
    %v1417 = vld [vmem:[%s3 + $0x44] sm:$0xf]
    %v1418 = vld [vmem:[%s3 + $0x48] sm:$0xf]
    %v1419 = vld [vmem:[%s3 + $0x4c] sm:$0xf]
    %v1420 = vld [vmem:[%s3 + $0x50] sm:$0xf]
    %v1421 = vld [vmem:[%s3 + $0x54] sm:$0xf]
    %v1422 = vld [vmem:[%s3 + $0x58] sm:$0xf]
    %v1423 = vld [vmem:[%s3 + $0x5c] sm:$0xf]
    %v1424 = vld [vmem:[%s3 + $0x60] sm:$0xf]
    %v1425 = vld [vmem:[%s3 + $0x64] sm:$0xf]
    %v1426 = vld [vmem:[%s3 + $0x68] sm:$0xf]
    %v1427 = vld [vmem:[%s3 + $0x6c] sm:$0xf]
    %v1428 = vld [vmem:[%s3 + $0x70] sm:$0xf]
    %v1429 = vld [vmem:[%s3 + $0x74] sm:$0xf]
    %v1430 = vld [vmem:[%s3 + $0x78] sm:$0xf]
    %v1431 = vld [vmem:[%s3 + $0x7c] sm:$0xf]
    %v1432 = vld [vmem:[%s3 + $0x80] sm:$0xf]
    %v1433 = vld [vmem:[%s3 + $0x84] sm:$0xf]
    %v1434 = vld [vmem:[%s3 + $0x88] sm:$0xf]
    %v1435 = vld [vmem:[%s3 + $0x8c] sm:$0xf]
    %v1436 = vld [vmem:[%s3 + $0x90] sm:$0xf]
    %v1437 = vld [vmem:[%s3 + $0x94] sm:$0xf]
    %v1438 = vld [vmem:[%s3 + $0x98] sm:$0xf]
    %v1439 = vld [vmem:[%s3 + $0x9c] sm:$0xf]
    %v1440 = vld [vmem:[%s3 + $0xa0] sm:$0xf]
    %v1441 = vld [vmem:[%s3 + $0xa4] sm:$0xf]
    %v1442 = vld [vmem:[%s3 + $0xa8] sm:$0xf]
    %v1443 = vld [vmem:[%s3 + $0xac] sm:$0xf]
    %v1444 = vld [vmem:[%s3 + $0xb0] sm:$0xf]
    %v1445 = vld [vmem:[%s3 + $0xb4] sm:$0xf]
    %v1446 = vld [vmem:[%s3 + $0xb8] sm:$0xf]
    %v1447 = vld [vmem:[%s3 + $0xbc] sm:$0xf]
    %v1448 = vld [vmem:[%s4] sm:$0x1]
    %v1450 = vlaneseq
    %v1451 = vshrl.u32 %v1450, 7
    %v1452 = vsub.s32 0, %v1451
    %v1453 = vrot.slane %v1448, %v1452
    %v1503 = vunpack.c.l.b16 %v1400
    %v1504 = vunpack.c.l.b16 %v1401
    %v1505 = vunpack.c.l.b16 %v1402
    %v1506 = vunpack.c.l.b16 %v1403
    %v1507 = vunpack.c.l.b16 %v1404
    %v1508 = vunpack.c.l.b16 %v1405
    %v1509 = vunpack.c.l.b16 %v1406
    %v1510 = vunpack.c.l.b16 %v1407
    %v1511 = vunpack.c.l.b16 %v1408
    %v1512 = vunpack.c.l.b16 %v1409
    %v1513 = vunpack.c.l.b16 %v1410
    %v1514 = vunpack.c.l.b16 %v1411
    %v1515 = vunpack.c.l.b16 %v1412
    %v1516 = vunpack.c.l.b16 %v1413
    %v1517 = vunpack.c.l.b16 %v1414
    %v1518 = vunpack.c.l.b16 %v1415
    %v1519 = vunpack.c.l.b16 %v1416
    %v1520 = vunpack.c.l.b16 %v1417
    %v1521 = vunpack.c.l.b16 %v1418
    %v1522 = vunpack.c.l.b16 %v1419
    %v1523 = vunpack.c.l.b16 %v1420
    %v1524 = vunpack.c.l.b16 %v1421
    %v1525 = vunpack.c.l.b16 %v1422
    %v1526 = vunpack.c.l.b16 %v1423
    %v1527 = vunpack.c.l.b16 %v1424
    %v1528 = vunpack.c.l.b16 %v1425
    %v1529 = vunpack.c.l.b16 %v1426
    %v1530 = vunpack.c.l.b16 %v1427
    %v1531 = vunpack.c.l.b16 %v1428
    %v1532 = vunpack.c.l.b16 %v1429
    %v1533 = vunpack.c.l.b16 %v1430
    %v1534 = vunpack.c.l.b16 %v1431
    %v1535 = vunpack.c.l.b16 %v1432
    %v1536 = vunpack.c.l.b16 %v1433
    %v1537 = vunpack.c.l.b16 %v1434
    %v1538 = vunpack.c.l.b16 %v1435
    %v1539 = vunpack.c.l.b16 %v1436
    %v1540 = vunpack.c.l.b16 %v1437
    %v1541 = vunpack.c.l.b16 %v1438
    %v1542 = vunpack.c.l.b16 %v1439
    %v1543 = vunpack.c.l.b16 %v1440
    %v1544 = vunpack.c.l.b16 %v1441
    %v1545 = vunpack.c.l.b16 %v1442
    %v1546 = vunpack.c.l.b16 %v1443
    %v1547 = vunpack.c.l.b16 %v1444
    %v1548 = vunpack.c.l.b16 %v1445
    %v1549 = vunpack.c.l.b16 %v1446
    %v1550 = vunpack.c.l.b16 %v1447
    %v1551 = vpack.c.b16 %v1504, %v1503
    %v1552 = vpack.c.b16 %v1506, %v1505
    %v1553 = vpack.c.b16 %v1508, %v1507
    %v1554 = vpack.c.b16 %v1510, %v1509
    %v1555 = vpack.c.b16 %v1512, %v1511
    %v1556 = vpack.c.b16 %v1514, %v1513
    %v1557 = vpack.c.b16 %v1516, %v1515
    %v1558 = vpack.c.b16 %v1518, %v1517
    %v1559 = vpack.c.b16 %v1520, %v1519
    %v1560 = vpack.c.b16 %v1522, %v1521
    %v1561 = vpack.c.b16 %v1524, %v1523
    %v1562 = vpack.c.b16 %v1526, %v1525
    %v1563 = vpack.c.b16 %v1528, %v1527
    %v1564 = vpack.c.b16 %v1530, %v1529
    %v1565 = vpack.c.b16 %v1532, %v1531
    %v1566 = vpack.c.b16 %v1534, %v1533
    %v1567 = vpack.c.b16 %v1536, %v1535
    %v1568 = vpack.c.b16 %v1538, %v1537
    %v1569 = vpack.c.b16 %v1540, %v1539
    %v1570 = vpack.c.b16 %v1542, %v1541
    %v1571 = vpack.c.b16 %v1544, %v1543
    %v1572 = vpack.c.b16 %v1546, %v1545
    %v1573 = vpack.c.b16 %v1548, %v1547
    %v1574 = vpack.c.b16 %v1550, %v1549
    %1599 = vmatprep.subr.bf16.mxu0 0
    %1600 = vmatpush1.bf16.msra.mxu0 %v1551
    %1601 = vmatprep.subr.bf16.mxu0 0
    %1602 = vmatpush1.bf16.msra.mxu0 %v1552
    %1603 = vmatprep.subr.bf16.mxu0 0
    %1604 = vmatpush1.bf16.msra.mxu0 %v1553
    %1605 = vmatprep.subr.bf16.mxu0 0
    %1606 = vmatpush1.bf16.msra.mxu0 %v1554
    %1607 = vmatprep.subr.bf16.mxu0 0
    %1608 = vmatpush1.bf16.msra.mxu0 %v1555
    %1609 = vmatprep.subr.bf16.mxu0 0
    %1610 = vmatpush1.bf16.msra.mxu0 %v1556
    %1611 = vmatprep.subr.bf16.mxu0 0
    %1612 = vmatpush1.bf16.msra.mxu0 %v1557
    %1613 = vmatprep.subr.bf16.mxu0 0
    %1614 = vmatpush1.bf16.msra.mxu0 %v1558
    %1615 = vmatprep.subr.bf16.mxu0 0
    %1616 = vmatpush1.bf16.msra.mxu0 %v1559
    %1617 = vmatprep.subr.bf16.mxu0 0
    %1618 = vmatpush1.bf16.msra.mxu0 %v1560
    %1619 = vmatprep.subr.bf16.mxu0 0
    %1620 = vmatpush1.bf16.msra.mxu0 %v1561
    %1621 = vmatprep.subr.bf16.mxu0 0
    %1622 = vmatpush1.bf16.msra.mxu0 %v1562
    %1623 = vmatprep.subr.bf16.mxu0 0
    %1624 = vmatpush1.bf16.msra.mxu0 %v1563
    %1625 = vmatprep.subr.bf16.mxu0 0
    %1626 = vmatpush1.bf16.msra.mxu0 %v1564
    %1627 = vmatprep.subr.bf16.mxu0 0
    %1628 = vmatpush1.bf16.msra.mxu0 %v1565
    %1629 = vmatprep.subr.bf16.mxu0 0
    %1630 = vmatpush1.bf16.msra.mxu0 %v1566
    %1631 = vmatprep.mubr.bf16.mxu0 %v1398
    %1632 = vmatmul.mubr.bf16.gmra.mrb[0].mxu0 %v1397
    %v1633 = vpop.f32.mrb[0].mxu0
    %v1634 = vadd.f32 %v1453, %v1633
    %v1635 = vpop.f32.mrb[0].mxu0
    %v1636 = vpop.f32.mrb[0].mxu0
    %v1637 = vpop.f32.mrb[0].mxu0
    %1638 = vdwg.mxu0
    %1639 = vmatprep.subr.bf16.mxu0 0
    %1640 = vmatpush1.bf16.msra.mxu0 %v1567
    %1641 = vmatprep.subr.bf16.mxu0 0
    %1642 = vmatpush1.bf16.msra.mxu0 %v1568
    %1643 = vmatprep.subr.bf16.mxu0 0
    %1644 = vmatpush1.bf16.msra.mxu0 %v1569
    %1645 = vmatprep.subr.bf16.mxu0 0
    %1646 = vmatpush1.bf16.msra.mxu0 %v1570
    %1647 = vmatprep.subr.bf16.mxu0 0
    %1648 = vmatpush1.bf16.msra.mxu0 %v1571
    %1649 = vmatprep.subr.bf16.mxu0 0
    %1650 = vmatpush1.bf16.msra.mxu0 %v1572
    %1651 = vmatprep.subr.bf16.mxu0 0
    %1652 = vmatpush1.bf16.msra.mxu0 %v1573
    %1653 = vmatprep.subr.bf16.mxu0 0
    %1654 = vmatpush1.bf16.msra.mxu0 %v1574
    %1655 = vmatprep.subr.bf16.mxu0 0
    %1656 = vmatpush1.bf16.msra.mxu0 0
    %1657 = vmatprep.subr.bf16.mxu0 0
    %1658 = vmatpush1.bf16.msra.mxu0 0
    %1659 = vmatprep.subr.bf16.mxu0 0
    %1660 = vmatpush1.bf16.msra.mxu0 0
    %1661 = vmatprep.subr.bf16.mxu0 0
    %1662 = vmatpush1.bf16.msra.mxu0 0
    %1663 = vmatprep.subr.bf16.mxu0 0
    %1664 = vmatpush1.bf16.msra.mxu0 0
    %1665 = vmatprep.subr.bf16.mxu0 0
    %1666 = vmatpush1.bf16.msra.mxu0 0
    %1667 = vmatprep.subr.bf16.mxu0 0
    %1668 = vmatpush1.bf16.msra.mxu0 0
    %1669 = vmatprep.subr.bf16.mxu0 0
    %1670 = vmatpush1.bf16.msra.mxu0 0
    %1671 = vmatprep.mubr.bf16.mxu0 0
    %1672 = vmatmul.mubr.bf16.gmra.mrb[0].mxu0 %v1399
    %v1673 = vpop.f32.mrb[0].mxu0
    %v1674 = vadd.f32 %v1634, %v1673
    %v1675 = vpop.f32.mrb[0].mxu0
    %v1676 = vpop.f32.mrb[0].mxu0
    %v1677 = vpop.f32.mrb[0].mxu0
    %1678 = vdwg.mxu0
    %v1679 = vmax.f32 %v1674, 0.0
    %v1680 = vpack.c.bf16 %v1679, %v1679
    %v1681 = vld [vmem:[%s5] sm:$0xf]
    %v1682 = vld [vmem:[%s5 + $0x4] sm:$0xf]
    %v1683 = vld [vmem:[%s5 + $0x8] sm:$0xf]
    %v1684 = vld [vmem:[%s5 + $0xc] sm:$0xf]
    %v1685 = vld [vmem:[%s5 + $0x10] sm:$0xf]
    %v1686 = vld [vmem:[%s5 + $0x14] sm:$0xf]
    %v1687 = vld [vmem:[%s5 + $0x18] sm:$0xf]
    %v1688 = vld [vmem:[%s5 + $0x1c] sm:$0xf]
    %v1689 = vld [vmem:[%s5 + $0x20] sm:$0xf]
    %v1690 = vld [vmem:[%s5 + $0x24] sm:$0xf]
    %v1691 = vld [vmem:[%s5 + $0x28] sm:$0xf]
    %v1692 = vld [vmem:[%s5 + $0x2c] sm:$0xf]
    %v1693 = vld [vmem:[%s5 + $0x30] sm:$0xf]
    %v1694 = vld [vmem:[%s5 + $0x34] sm:$0xf]
    %v1695 = vld [vmem:[%s5 + $0x38] sm:$0xf]
    %v1696 = vld [vmem:[%s5 + $0x3c] sm:$0xf]
    %v1697 = vld [vmem:[%s6] sm:$0x1]
    %v1699 = vlaneseq
    %v1700 = vshrl.u32 %v1699, 7
    %v1701 = vsub.s32 0, %v1700
    %v1702 = vrot.slane %v1697, %v1701
    %v1720 = vunpack.c.l.b16 %v1681
    %v1721 = vunpack.c.l.b16 %v1682
    %v1722 = vunpack.c.l.b16 %v1683
    %v1723 = vunpack.c.l.b16 %v1684
    %v1724 = vunpack.c.l.b16 %v1685
    %v1725 = vunpack.c.l.b16 %v1686
    %v1726 = vunpack.c.l.b16 %v1687
    %v1727 = vunpack.c.l.b16 %v1688
    %v1728 = vunpack.c.l.b16 %v1689
    %v1729 = vunpack.c.l.b16 %v1690
    %v1730 = vunpack.c.l.b16 %v1691
    %v1731 = vunpack.c.l.b16 %v1692
    %v1732 = vunpack.c.l.b16 %v1693
    %v1733 = vunpack.c.l.b16 %v1694
    %v1734 = vunpack.c.l.b16 %v1695
    %v1735 = vunpack.c.l.b16 %v1696
    %v1736 = vpack.c.b16 %v1721, %v1720
    %v1737 = vpack.c.b16 %v1723, %v1722
    %v1738 = vpack.c.b16 %v1725, %v1724
    %v1739 = vpack.c.b16 %v1727, %v1726
    %v1740 = vpack.c.b16 %v1729, %v1728
    %v1741 = vpack.c.b16 %v1731, %v1730
    %v1742 = vpack.c.b16 %v1733, %v1732
    %v1743 = vpack.c.b16 %v1735, %v1734
    %1752 = vmatprep.subr.bf16.mxu0 0
    %1753 = vmatpush1.bf16.msra.mxu0 %v1736
    %1754 = vmatprep.subr.bf16.mxu0 0
    %1755 = vmatpush1.bf16.msra.mxu0 %v1737
    %1756 = vmatprep.subr.bf16.mxu0 0
    %1757 = vmatpush1.bf16.msra.mxu0 %v1738
    %1758 = vmatprep.subr.bf16.mxu0 0
    %1759 = vmatpush1.bf16.msra.mxu0 %v1739
    %1760 = vmatprep.subr.bf16.mxu0 0
    %1761 = vmatpush1.bf16.msra.mxu0 %v1740
    %1762 = vmatprep.subr.bf16.mxu0 0
    %1763 = vmatpush1.bf16.msra.mxu0 %v1741
    %1764 = vmatprep.subr.bf16.mxu0 0
    %1765 = vmatpush1.bf16.msra.mxu0 %v1742
    %1766 = vmatprep.subr.bf16.mxu0 0
    %1767 = vmatpush1.bf16.msra.mxu0 %v1743
    %1768 = vmatprep.subr.bf16.mxu0 0
    %1769 = vmatpush1.bf16.msra.mxu0 0
    %1770 = vmatprep.subr.bf16.mxu0 0
    %1771 = vmatpush1.bf16.msra.mxu0 0
    %1772 = vmatprep.subr.bf16.mxu0 0
    %1773 = vmatpush1.bf16.msra.mxu0 0
    %1774 = vmatprep.subr.bf16.mxu0 0
    %1775 = vmatpush1.bf16.msra.mxu0 0
    %1776 = vmatprep.subr.bf16.mxu0 0
    %1777 = vmatpush1.bf16.msra.mxu0 0
    %1778 = vmatprep.subr.bf16.mxu0 0
    %1779 = vmatpush1.bf16.msra.mxu0 0
    %1780 = vmatprep.subr.bf16.mxu0 0
    %1781 = vmatpush1.bf16.msra.mxu0 0
    %1782 = vmatprep.subr.bf16.mxu0 0
    %1783 = vmatpush1.bf16.msra.mxu0 0
    %1784 = vmatprep.mubr.bf16.mxu0 0
    %1785 = vmatmul.mubr.bf16.gmra.mrb[0].mxu0 %v1680
    %v1786 = vpop.f32.mrb[0].mxu0
    %v1787 = vadd.f32 %v1702, %v1786
    %v1788 = vpop.f32.mrb[0].mxu0
    %v1789 = vpop.f32.mrb[0].mxu0
    %v1790 = vpop.f32.mrb[0].mxu0
    %1791 = vdwg.mxu0
    %1792 = vst [vmem:[%s7] sm:$0xff] %v1787
    // Predicated region
    $region34: #{lenet300_100j_forward.1} parent=1 // pred_check
      _
    $region35: #{lenet300_100j_forward.1} parent=1 // pred_check_branch
      %1794 = sbr.rel (0) target = $region37
    $region36: #{lenet300_100j_forward.1} parent=1 // pred_region
      _
    $region37: #{lenet300_100j_forward.1} parent=1 // pred_fallthru
      _
    // Predicated region
    $region38: #{lenet300_100j_forward.1} parent=1 // pred_check
      _
    $region39: #{lenet300_100j_forward.1} parent=1 // pred_check_branch
      %1796 = sbr.rel (0) target = $region41
    $region40: #{lenet300_100j_forward.1} parent=1 // pred_region
      _
    $region41: #{lenet300_100j_forward.1} parent=1 // pred_fallthru
      _
    %1797 = vsyncpa [#allocation3], 1

</llo_original>
